<compile_context>
chip_gen: v5e
topology: v5e:2x2
jax: 0.10.0
libtpu: 0.0.40
codegen_flags: <defaults>
</compile_context>

<pallas_src>
import jax
import jax.numpy as jnp
import numpy as np
from jax.experimental import pallas as pl
from jax.experimental.pallas import tpu as pltpu

H = W = 14
S = H * W          # 196 spatial positions
C_FEAT = 512       # resnet34 embedding channels
C_RED = 30         # conv1 output channels / search_info width
C_P = 3            # pointwise_p output channels
FLAT = C_P * S     # 588
HID = 60


# ----------------------------------------------------------------------------
# Fused kernel: one grid step processes `block_b` batch elements in VMEM,
# channel-major.  Outputs: pred (B, 30, 1) and logit_p (B, 1, 30).
# ----------------------------------------------------------------------------
def fused_kernel(feat_ref,            # (block_b, 512, 196)   f32 or bf16
                 ts_ref,              # (block_b, 33, 1)  rows 0:30 = t1, 30:33 = t2s
                 wc1_ref,             # (30, 512)  (same dtype as feat)
                 bc1_ref,             # (30, 1)
                 wpw1r_ref,           # (30, 30)
                 wpwpp_ref,           # (3, 30)
                 wpwpr_ref,           # (3, 30)
                 w1_ref,              # (3, 196, 60)  = lin1_w.T reshaped channel-major
                 b1_ref,              # (1, 60)
                 w2_ref,              # (60, 30)
                 b2_ref,              # (1, 30)
                 pred_ref,            # out: (block_b, 30, 1)
                 logit_ref,           # out: (block_b, 1, 30)
                 comb_ref):           # scratch: (block_b, 3, 196) f32
    block_b = feat_ref.shape[0]

    # Per-batch front half.  fori_loop (not Python unroll) bounds live ranges;
    # weights are read from refs at point of use (Mosaic re-issues vlds near
    # each matmul instead of keeping 100+ vregs live).
    def body(b, carry):
        # reduced_feat = relu(conv1(feat))                  -> (30, 196)
        reduced = jnp.maximum(
            jnp.dot(wc1_ref[...], feat_ref[b],
                    preferred_element_type=jnp.float32) + bc1_ref[...],
            0.0)

        ts_b = ts_ref[b]                                    # (33, 1)

        # concat_feat = relu(pointwise_1(cat(reduced, search_tile)))  (concat folded)
        concat = jnp.maximum(
            jnp.dot(wpw1r_ref[...], reduced,
                    preferred_element_type=jnp.float32) + ts_b[0:C_RED, :],
            0.0)                                            # (30, 196)

        # GAP over spatial (lane axis) + sigmoid            -> (30, 1)
        gap = jnp.mean(concat, axis=1, keepdims=True)
        pred = jax.nn.sigmoid(gap)
        pred_ref[b] = pred

        # combined_feat_p = relu(pointwise_p(cat(pred_tile, reduced, search_tile)))
        t2 = jnp.dot(wpwpp_ref[...], pred,
                     preferred_element_type=jnp.float32) + ts_b[C_RED:, :]   # (3, 1)
        comb_ref[b] = jnp.maximum(
            jnp.dot(wpwpr_ref[...], reduced,
                    preferred_element_type=jnp.float32) + t2,
            0.0)                                            # (3, 196)
        return carry

    jax.lax.fori_loop(0, block_b, body, 0, unroll=2)

    # Batched epilogue: 588 -> 60 -> relu -> 30 across the whole block.
    # Channel-major flatten is free: flat[c*196+s] == comb[c, s].
    h = b1_ref[...]                                          # (1, 60), broadcasts
    for c in range(C_P):
        h = h + jnp.dot(comb_ref[:, c, :], w1_ref[c],
                        preferred_element_type=jnp.float32)  # (block_b,196)@(196,60)
    h = jnp.maximum(h, 0.0)
    logit_ref[:, 0, :] = (jnp.dot(h, w2_ref[...],
                                  preferred_element_type=jnp.float32)
                          + b2_ref[...])                     # (block_b, 30)


# ----------------------------------------------------------------------------
# Wrapper
# ----------------------------------------------------------------------------
def _pick_block_b(B, cap=16):
    """Largest divisor of B not exceeding `cap` -> no batch padding ever needed."""
    cap = max(1, min(cap, B))
    for bb in range(cap, 0, -1):
        if B % bb == 0:
            return bb
    return 1


def model_forward(feat_ext_nchw, search_info, p, block_b=None):
    B = feat_ext_nchw.shape[0]

    # Free contiguous reshape: NCHW -> (B, C, H*W).  No transpose, no HBM round trip.
    feat = feat_ext_nchw.reshape(B, C_FEAT, S)

    # search_info-only affine terms (independent of the feature map), merged into one
    # tiny (B, 33, 1) input: rows 0:30 = pointwise_1 term, rows 30:33 = pointwise_p term.
    sinfo = search_info.astype(jnp.float32)
    t1 = sinfo @ p["pw1_w"][:, C_RED:].T + p["pw1_b"]              # (B, 30)
    t2s = sinfo @ p["pwp_w"][:, 2 * C_RED:].T + p["pwp_b"]         # (B, 3)
    ts = jnp.concatenate([t1, t2s], axis=1).reshape(B, C_RED + C_P, 1)

    # Batch blocking: largest divisor of B up to 16 (no padding; single-TC chips get
    # the biggest possible block, dual-TC v7x still gets >=2 blocks once B >= 32).
    if block_b is None:
        block_b = _pick_block_b(B)
    assert B % block_b == 0, "block_b must divide B (avoids padding the feature map)"
    n_blocks = B // block_b

    # Channel-major weight views (tiny; folded by XLA).  conv1 weight matches feat
    # dtype so a bf16 feature map runs the bf16 MXU path (accumulation stays f32).
    wc1 = p["conv1_w"].astype(feat.dtype)                # (30, 512)
    bc1 = p["conv1_b"].reshape(C_RED, 1)
    wpw1r = p["pw1_w"][:, :C_RED]                        # (30, 30)
    wpwpp = p["pwp_w"][:, :C_RED]                        # (3, 30)
    wpwpr = p["pwp_w"][:, C_RED:2 * C_RED]               # (3, 30)
    w1 = p["lin1_w"].T.reshape(C_P, S, HID)              # (3, 196, 60)
    b1 = p["lin1_b"].reshape(1, HID)
    w2 = p["lin2_w"].T                                   # (60, 30)
    b2 = p["lin2_b"].reshape(1, C_RED)

    def wspec(shape):
        nd = len(shape)
        return pl.BlockSpec(shape, lambda i, nd=nd: (0,) * nd)

    # VMEM budget: feat block double-buffered (196 lane-pads to 256) + weights/scratch.
    itemsize = feat.dtype.itemsize
    vmem_need = 2 * block_b * C_FEAT * 256 * itemsize + (8 << 20)
    vmem_limit = int(min(max(vmem_need, 32 << 20), 100 << 20))

    flops = int(2 * B * S * (C_RED * C_FEAT + C_RED * C_RED + C_P * C_RED)
                + 2 * B * (FLAT * HID + HID * C_RED)
                + 2 * B * C_P * C_RED)
    bytes_acc = int(feat.size * itemsize + ts.size * 4
                    + wc1.size * itemsize
                    + (w1.size + w2.size + wpw1r.size + wpwpp.size + wpwpr.size
                       + bc1.size + b1.size + b2.size) * 4
                    + B * (2 * C_RED) * 4)

    pred_c, logit_r = pl.pallas_call(
        fused_kernel,
        grid=(n_blocks,),
        in_specs=[
            pl.BlockSpec((block_b, C_FEAT, S), lambda i: (i, 0, 0)),        # feat
            pl.BlockSpec((block_b, C_RED + C_P, 1), lambda i: (i, 0, 0)),   # ts
            wspec((C_RED, C_FEAT)),   # conv1 W
            wspec((C_RED, 1)),        # conv1 b
            wspec((C_RED, C_RED)),    # pointwise_1 W (reduced half)
            wspec((C_P, C_RED)),      # pointwise_p W (pred slice)
            wspec((C_P, C_RED)),      # pointwise_p W (reduced slice)
            wspec((C_P, S, HID)),     # lin1 W (channel-major reshape)
            wspec((1, HID)),          # lin1 b
            wspec((HID, C_RED)),      # lin2 W
            wspec((1, C_RED)),        # lin2 b
        ],
        out_specs=(
            pl.BlockSpec((block_b, C_RED, 1), lambda i: (i, 0, 0)),
            pl.BlockSpec((block_b, 1, C_RED), lambda i: (i, 0, 0)),
        ),
        out_shape=(
            jax.ShapeDtypeStruct((B, C_RED, 1), jnp.float32),
            jax.ShapeDtypeStruct((B, 1, C_RED), jnp.float32),
        ),
        scratch_shapes=[pltpu.VMEM((block_b, C_P, S), jnp.float32)],
        compiler_params=pltpu.CompilerParams(
            dimension_semantics=("parallel",),
            vmem_limit_bytes=vmem_limit),
        cost_estimate=pl.CostEstimate(
            flops=flops, transcendentals=B * C_RED, bytes_accessed=bytes_acc),
    )(feat, ts, wc1, bc1, wpw1r, wpwpp, wpwpr, w1, b1, w2, b2)

    pred = pred_c.reshape(B, C_RED)
    logit_p = logit_r.reshape(B, C_RED)
    return pred, logit_p


# ----------------------------------------------------------------------------
# Deterministic synthetic parameters in PyTorch layout:
#   conv weights (out, in), Linear weights (out, in), 1-D biases.
# ----------------------------------------------------------------------------
def init_params(key):
    ks = jax.random.split(key, 10)
    s = 0.05
    return {
        "conv1_w": s * jax.random.normal(ks[0], (C_RED, C_FEAT), jnp.float32),
        "conv1_b": s * jax.random.normal(ks[1], (C_RED,), jnp.float32),
        # pointwise_1: 60 -> 30, columns = [reduced(0:30) | search(30:60)]
        "pw1_w":   s * jax.random.normal(ks[2], (C_RED, 2 * C_RED), jnp.float32),
        "pw1_b":   s * jax.random.normal(ks[3], (C_RED,), jnp.float32),
        # pointwise_p: 90 -> 3, columns = [pred(0:30) | reduced(30:60) | search(60:90)]
        "pwp_w":   s * jax.random.normal(ks[4], (C_P, 3 * C_RED), jnp.float32),
        "pwp_b":   s * jax.random.normal(ks[5], (C_P,), jnp.float32),
        "lin1_w":  s * jax.random.normal(ks[6], (HID, FLAT), jnp.float32),
        "lin1_b":  s * jax.random.normal(ks[7], (HID,), jnp.float32),
        "lin2_w":  s * jax.random.normal(ks[8], (C_RED, HID), jnp.float32),
        "lin2_b":  jnp.zeros((C_RED,), jnp.float32),
    }


# ----------------------------------------------------------------------------
# Pure-JAX reference (explicit concatenation + tiling, channel-last, as in PyTorch)
# ----------------------------------------------------------------------------
def reference_forward(feat_ext_nchw, search_info, p):
    B = feat_ext_nchw.shape[0]
    feat = jnp.transpose(feat_ext_nchw.astype(jnp.float32), (0, 2, 3, 1)).reshape(B, S, C_FEAT)
    reduced = jax.nn.relu(feat @ p["conv1_w"].T + p["conv1_b"])
    tile = jnp.broadcast_to(search_info[:, None, :], (B, S, C_RED))
    inp = jnp.concatenate([reduced, tile], axis=-1)                  # (B,196,60)
    concat_feat = jax.nn.relu(inp @ p["pw1_w"].T + p["pw1_b"])       # (B,196,30)
    gap = jnp.mean(concat_feat, axis=1)                              # (B,30)
    pred = jax.nn.sigmoid(gap)
    pred_tile = jnp.broadcast_to(pred[:, None, :], (B, S, C_RED))
    info_cat = jnp.concatenate([pred_tile, inp], axis=-1)            # (B,196,90)
    comb = jax.nn.relu(info_cat @ p["pwp_w"].T + p["pwp_b"])         # (B,196,3)
    flat = jnp.transpose(comb.reshape(B, H, W, C_P), (0, 3, 1, 2)).reshape(B, FLAT)
    h = jax.nn.relu(flat @ p["lin1_w"].T + p["lin1_b"])
    logit_p = h @ p["lin2_w"].T + p["lin2_b"]
    return pred, logit_p


if __name__ == "__main__":
    key = jax.random.PRNGKey(0)
    k_feat, k_search, k_param = jax.random.split(key, 3)

    B = 2
    # feat_ext = output of the (omitted) frozen resnet34 backbone, NCHW
    feat_ext = jax.random.normal(k_feat, (B, C_FEAT, H, W), jnp.float32)
    search_info = jax.random.normal(k_search, (B, C_RED), jnp.float32)
    params = init_params(k_param)

    # --- f32 path: bit-exact-ish against the pure-JAX reference -------------
    pred, logit_p = model_forward(feat_ext, search_info, params)
    pred, logit_p = jax.block_until_ready((pred, logit_p))

    ref_pred, ref_logit = reference_forward(feat_ext, search_info, params)
    np.testing.assert_allclose(np.asarray(pred), np.asarray(ref_pred),
                               rtol=1e-4, atol=1e-4)
    np.testing.assert_allclose(np.asarray(logit_p), np.asarray(ref_logit),
                               rtol=1e-4, atol=1e-4)

    # --- bf16 feature-map path (halves the bandwidth-bound feat DMA) --------
    feat_bf16 = feat_ext.astype(jnp.bfloat16)
    pred_b, logit_b = model_forward(feat_bf16, search_info, params)
    pred_b, logit_b = jax.block_until_ready((pred_b, logit_b))
    ref_pred_b, ref_logit_b = reference_forward(feat_bf16, search_info, params)
    np.testing.assert_allclose(np.asarray(pred_b), np.asarray(ref_pred_b),
                               rtol=5e-2, atol=5e-2)
    np.testing.assert_allclose(np.asarray(logit_b), np.asarray(ref_logit_b),
                               rtol=5e-2, atol=5e-2)

    print("KERNEL_OK")
</pallas_src>

<mosaic_0001>
module attributes {stable_mosaic.version = 11 : i64} {
  func.func @fused_kernel(%arg0: i32, %arg1: memref<2x512x196xf32, #tpu.memory_space<vmem>>, %arg2: memref<2x33x1xf32, #tpu.memory_space<vmem>>, %arg3: memref<30x512xf32, #tpu.memory_space<vmem>>, %arg4: memref<30x1xf32, #tpu.memory_space<vmem>>, %arg5: memref<30x30xf32, #tpu.memory_space<vmem>>, %arg6: memref<3x30xf32, #tpu.memory_space<vmem>>, %arg7: memref<3x30xf32, #tpu.memory_space<vmem>>, %arg8: memref<3x196x60xf32, #tpu.memory_space<vmem>>, %arg9: memref<1x60xf32, #tpu.memory_space<vmem>>, %arg10: memref<60x30xf32, #tpu.memory_space<vmem>>, %arg11: memref<1x30xf32, #tpu.memory_space<vmem>>, %arg12: memref<2x30x1xf32, #tpu.memory_space<vmem>>, %arg13: memref<2x1x30xf32, #tpu.memory_space<vmem>>, %arg14: memref<2x3x196xf32, #tpu.memory_space<vmem>>) attributes {dimension_semantics = [#tpu.dimension_semantics<parallel>], iteration_bounds = array<i64: 1>, scalar_prefetch = 0 : i64, scratch_operands = 1 : i64, tpu.core_type = #tpu.core_type<tc>, window_params = [{transform_indices = @transform_0, window_bounds = array<i64: 2, 512, 196>}, {transform_indices = @transform_1, window_bounds = array<i64: 2, 33, 1>}, {pipeline_mode = #tpu.pipeline_mode<synchronous>, transform_indices = @transform_2, window_bounds = array<i64: 30, 512>}, {pipeline_mode = #tpu.pipeline_mode<synchronous>, transform_indices = @transform_3, window_bounds = array<i64: 30, 1>}, {pipeline_mode = #tpu.pipeline_mode<synchronous>, transform_indices = @transform_4, window_bounds = array<i64: 30, 30>}, {pipeline_mode = #tpu.pipeline_mode<synchronous>, transform_indices = @transform_5, window_bounds = array<i64: 3, 30>}, {pipeline_mode = #tpu.pipeline_mode<synchronous>, transform_indices = @transform_6, window_bounds = array<i64: 3, 30>}, {pipeline_mode = #tpu.pipeline_mode<synchronous>, transform_indices = @transform_7, window_bounds = array<i64: 3, 196, 60>}, {pipeline_mode = #tpu.pipeline_mode<synchronous>, transform_indices = @transform_8, window_bounds = array<i64: 1, 60>}, {pipeline_mode = #tpu.pipeline_mode<synchronous>, transform_indices = @transform_9, window_bounds = array<i64: 60, 30>}, {pipeline_mode = #tpu.pipeline_mode<synchronous>, transform_indices = @transform_10, window_bounds = array<i64: 1, 30>}, {transform_indices = @transform_11, window_bounds = array<i64: 2, 30, 1>}, {transform_indices = @transform_12, window_bounds = array<i64: 2, 1, 30>}]} {
    %c0_i32 = arith.constant 0 : i32
    %c0 = arith.constant 0 : index
    %c0_0 = arith.constant 0 : index
    %0 = vector.load %arg3[%c0, %c0_0] : memref<30x512xf32, #tpu.memory_space<vmem>>, vector<30x512xf32>
    %1 = arith.index_cast %c0_i32 : i32 to index
    %c0_1 = arith.constant 0 : index
    %c0_2 = arith.constant 0 : index
    %2 = vector.load %arg1[%1, %c0_1, %c0_2] : memref<2x512x196xf32, #tpu.memory_space<vmem>>, vector<1x512x196xf32>
    %3 = vector.shape_cast %2 : vector<1x512x196xf32> to vector<512x196xf32>
    %cst = arith.constant dense<0.000000e+00> : vector<30x196xf32>
    %4 = tpu.matmul %0, %3, %cst {dimension_numbers = #tpu.dot_dimension_numbers<[1], [0], [0], [1], [0, 0, 1, 1], [], []>} : vector<30x512xf32>, vector<512x196xf32>, vector<30x196xf32> -> vector<30x196xf32>
    %c0_3 = arith.constant 0 : index
    %c0_4 = arith.constant 0 : index
    %5 = vector.load %arg4[%c0_3, %c0_4] : memref<30x1xf32, #tpu.memory_space<vmem>>, vector<30x1xf32>
    %6 = vector.broadcast %5 : vector<30x1xf32> to vector<30x196xf32>
    %7 = arith.addf %4, %6 : vector<30x196xf32>
    %cst_5 = arith.constant 0.000000e+00 : f32
    %8 = vector.broadcast %cst_5 : f32 to vector<30x196xf32>
    %9 = arith.maximumf %7, %8 : vector<30x196xf32>
    %10 = arith.index_cast %c0_i32 : i32 to index
    %c0_6 = arith.constant 0 : index
    %c0_7 = arith.constant 0 : index
    %11 = vector.load %arg2[%10, %c0_6, %c0_7] : memref<2x33x1xf32, #tpu.memory_space<vmem>>, vector<1x33x1xf32>
    %12 = vector.shape_cast %11 : vector<1x33x1xf32> to vector<33x1xf32>
    %c0_8 = arith.constant 0 : index
    %c0_9 = arith.constant 0 : index
    %13 = vector.load %arg5[%c0_8, %c0_9] : memref<30x30xf32, #tpu.memory_space<vmem>>, vector<30x30xf32>
    %cst_10 = arith.constant dense<0.000000e+00> : vector<30x196xf32>
    %14 = tpu.matmul %13, %9, %cst_10 {dimension_numbers = #tpu.dot_dimension_numbers<[1], [0], [0], [1], [0, 0, 1, 1], [], []>} : vector<30x30xf32>, vector<30x196xf32>, vector<30x196xf32> -> vector<30x196xf32>
    %15 = vector.extract_strided_slice %12 {offsets = [0, 0], sizes = [30, 1], strides = [1, 1]} : vector<33x1xf32> to vector<30x1xf32>
    %16 = vector.broadcast %15 : vector<30x1xf32> to vector<30x196xf32>
    %17 = arith.addf %14, %16 : vector<30x196xf32>
    %cst_11 = arith.constant 0.000000e+00 : f32
    %18 = vector.broadcast %cst_11 : f32 to vector<30x196xf32>
    %19 = arith.maximumf %17, %18 : vector<30x196xf32>
    %cst_12 = arith.constant dense<0.000000e+00> : vector<30xf32>
    %20 = vector.multi_reduction <add>, %19, %cst_12 [1] : vector<30x196xf32> to vector<30xf32>
    %21 = vector.shape_cast %20 : vector<30xf32> to vector<30x1xf32>
    %cst_13 = arith.constant 1.960000e+02 : f32
    %22 = vector.broadcast %cst_13 : f32 to vector<30x1xf32>
    %23 = arith.divf %21, %22 : vector<30x1xf32>
    %24 = arith.negf %23 : vector<30x1xf32>
    %25 = math.exp %24 : vector<30x1xf32>
    %cst_14 = arith.constant 1.000000e+00 : f32
    %26 = vector.broadcast %cst_14 : f32 to vector<30x1xf32>
    %27 = arith.addf %26, %25 : vector<30x1xf32>
    %28 = arith.divf %26, %27 : vector<30x1xf32>
    %29 = arith.index_cast %c0_i32 : i32 to index
    %c0_15 = arith.constant 0 : index
    %c0_16 = arith.constant 0 : index
    %30 = vector.load %arg12[%29, %c0_15, %c0_16] : memref<2x30x1xf32, #tpu.memory_space<vmem>>, vector<1x30x1xf32>
    %31 = vector.shape_cast %30 : vector<1x30x1xf32> to vector<30x1xf32>
    %32 = vector.shape_cast %28 : vector<30x1xf32> to vector<1x30x1xf32>
    tpu.vector_store %arg12[%29, %c0_15, %c0_16], %32 {strides = array<i32>} : memref<2x30x1xf32, #tpu.memory_space<vmem>>, vector<1x30x1xf32>,
    %c0_17 = arith.constant 0 : index
    %c0_18 = arith.constant 0 : index
    %33 = vector.load %arg6[%c0_17, %c0_18] : memref<3x30xf32, #tpu.memory_space<vmem>>, vector<3x30xf32>
    %cst_19 = arith.constant dense<0.000000e+00> : vector<3x1xf32>
    %34 = tpu.matmul %33, %28, %cst_19 {dimension_numbers = #tpu.dot_dimension_numbers<[1], [0], [0], [1], [0, 0, 1, 1], [], []>} : vector<3x30xf32>, vector<30x1xf32>, vector<3x1xf32> -> vector<3x1xf32>
    %35 = vector.extract_strided_slice %12 {offsets = [30, 0], sizes = [3, 1], strides = [1, 1]} : vector<33x1xf32> to vector<3x1xf32>
    %36 = arith.addf %34, %35 : vector<3x1xf32>
    %c0_20 = arith.constant 0 : index
    %c0_21 = arith.constant 0 : index
    %37 = vector.load %arg7[%c0_20, %c0_21] : memref<3x30xf32, #tpu.memory_space<vmem>>, vector<3x30xf32>
    %cst_22 = arith.constant dense<0.000000e+00> : vector<3x196xf32>
    %38 = tpu.matmul %37, %9, %cst_22 {dimension_numbers = #tpu.dot_dimension_numbers<[1], [0], [0], [1], [0, 0, 1, 1], [], []>} : vector<3x30xf32>, vector<30x196xf32>, vector<3x196xf32> -> vector<3x196xf32>
    %39 = vector.broadcast %36 : vector<3x1xf32> to vector<3x196xf32>
    %40 = arith.addf %38, %39 : vector<3x196xf32>
    %cst_23 = arith.constant 0.000000e+00 : f32
    %41 = vector.broadcast %cst_23 : f32 to vector<3x196xf32>
    %42 = arith.maximumf %40, %41 : vector<3x196xf32>
    %43 = arith.index_cast %c0_i32 : i32 to index
    %c0_24 = arith.constant 0 : index
    %c0_25 = arith.constant 0 : index
    %44 = vector.load %arg14[%43, %c0_24, %c0_25] : memref<2x3x196xf32, #tpu.memory_space<vmem>>, vector<1x3x196xf32>
    %45 = vector.shape_cast %44 : vector<1x3x196xf32> to vector<3x196xf32>
    %46 = vector.shape_cast %42 : vector<3x196xf32> to vector<1x3x196xf32>
    tpu.vector_store %arg14[%43, %c0_24, %c0_25], %46 {strides = array<i32>} : memref<2x3x196xf32, #tpu.memory_space<vmem>>, vector<1x3x196xf32>,
    %c1_i32 = arith.constant 1 : i32
    %c0_26 = arith.constant 0 : index
    %c0_27 = arith.constant 0 : index
    %47 = vector.load %arg3[%c0_26, %c0_27] : memref<30x512xf32, #tpu.memory_space<vmem>>, vector<30x512xf32>
    %48 = arith.index_cast %c1_i32 : i32 to index
    %c0_28 = arith.constant 0 : index
    %c0_29 = arith.constant 0 : index
    %49 = vector.load %arg1[%48, %c0_28, %c0_29] : memref<2x512x196xf32, #tpu.memory_space<vmem>>, vector<1x512x196xf32>
    %50 = vector.shape_cast %49 : vector<1x512x196xf32> to vector<512x196xf32>
    %cst_30 = arith.constant dense<0.000000e+00> : vector<30x196xf32>
    %51 = tpu.matmul %47, %50, %cst_30 {dimension_numbers = #tpu.dot_dimension_numbers<[1], [0], [0], [1], [0, 0, 1, 1], [], []>} : vector<30x512xf32>, vector<512x196xf32>, vector<30x196xf32> -> vector<30x196xf32>
    %c0_31 = arith.constant 0 : index
    %c0_32 = arith.constant 0 : index
    %52 = vector.load %arg4[%c0_31, %c0_32] : memref<30x1xf32, #tpu.memory_space<vmem>>, vector<30x1xf32>
    %53 = vector.broadcast %52 : vector<30x1xf32> to vector<30x196xf32>
    %54 = arith.addf %51, %53 : vector<30x196xf32>
    %cst_33 = arith.constant 0.000000e+00 : f32
    %55 = vector.broadcast %cst_33 : f32 to vector<30x196xf32>
    %56 = arith.maximumf %54, %55 : vector<30x196xf32>
    %57 = arith.index_cast %c1_i32 : i32 to index
    %c0_34 = arith.constant 0 : index
    %c0_35 = arith.constant 0 : index
    %58 = vector.load %arg2[%57, %c0_34, %c0_35] : memref<2x33x1xf32, #tpu.memory_space<vmem>>, vector<1x33x1xf32>
    %59 = vector.shape_cast %58 : vector<1x33x1xf32> to vector<33x1xf32>
    %c0_36 = arith.constant 0 : index
    %c0_37 = arith.constant 0 : index
    %60 = vector.load %arg5[%c0_36, %c0_37] : memref<30x30xf32, #tpu.memory_space<vmem>>, vector<30x30xf32>
    %cst_38 = arith.constant dense<0.000000e+00> : vector<30x196xf32>
    %61 = tpu.matmul %60, %56, %cst_38 {dimension_numbers = #tpu.dot_dimension_numbers<[1], [0], [0], [1], [0, 0, 1, 1], [], []>} : vector<30x30xf32>, vector<30x196xf32>, vector<30x196xf32> -> vector<30x196xf32>
    %62 = vector.extract_strided_slice %59 {offsets = [0, 0], sizes = [30, 1], strides = [1, 1]} : vector<33x1xf32> to vector<30x1xf32>
    %63 = vector.broadcast %62 : vector<30x1xf32> to vector<30x196xf32>
    %64 = arith.addf %61, %63 : vector<30x196xf32>
    %cst_39 = arith.constant 0.000000e+00 : f32
    %65 = vector.broadcast %cst_39 : f32 to vector<30x196xf32>
    %66 = arith.maximumf %64, %65 : vector<30x196xf32>
    %cst_40 = arith.constant dense<0.000000e+00> : vector<30xf32>
    %67 = vector.multi_reduction <add>, %66, %cst_40 [1] : vector<30x196xf32> to vector<30xf32>
    %68 = vector.shape_cast %67 : vector<30xf32> to vector<30x1xf32>
    %cst_41 = arith.constant 1.960000e+02 : f32
    %69 = vector.broadcast %cst_41 : f32 to vector<30x1xf32>
    %70 = arith.divf %68, %69 : vector<30x1xf32>
    %71 = arith.negf %70 : vector<30x1xf32>
    %72 = math.exp %71 : vector<30x1xf32>
    %cst_42 = arith.constant 1.000000e+00 : f32
    %73 = vector.broadcast %cst_42 : f32 to vector<30x1xf32>
    %74 = arith.addf %73, %72 : vector<30x1xf32>
    %75 = arith.divf %73, %74 : vector<30x1xf32>
    %76 = arith.index_cast %c1_i32 : i32 to index
    %c0_43 = arith.constant 0 : index
    %c0_44 = arith.constant 0 : index
    %77 = vector.load %arg12[%76, %c0_43, %c0_44] : memref<2x30x1xf32, #tpu.memory_space<vmem>>, vector<1x30x1xf32>
    %78 = vector.shape_cast %77 : vector<1x30x1xf32> to vector<30x1xf32>
    %79 = vector.shape_cast %75 : vector<30x1xf32> to vector<1x30x1xf32>
    tpu.vector_store %arg12[%76, %c0_43, %c0_44], %79 {strides = array<i32>} : memref<2x30x1xf32, #tpu.memory_space<vmem>>, vector<1x30x1xf32>,
    %c0_45 = arith.constant 0 : index
    %c0_46 = arith.constant 0 : index
    %80 = vector.load %arg6[%c0_45, %c0_46] : memref<3x30xf32, #tpu.memory_space<vmem>>, vector<3x30xf32>
    %cst_47 = arith.constant dense<0.000000e+00> : vector<3x1xf32>
    %81 = tpu.matmul %80, %75, %cst_47 {dimension_numbers = #tpu.dot_dimension_numbers<[1], [0], [0], [1], [0, 0, 1, 1], [], []>} : vector<3x30xf32>, vector<30x1xf32>, vector<3x1xf32> -> vector<3x1xf32>
    %82 = vector.extract_strided_slice %59 {offsets = [30, 0], sizes = [3, 1], strides = [1, 1]} : vector<33x1xf32> to vector<3x1xf32>
    %83 = arith.addf %81, %82 : vector<3x1xf32>
    %c0_48 = arith.constant 0 : index
    %c0_49 = arith.constant 0 : index
    %84 = vector.load %arg7[%c0_48, %c0_49] : memref<3x30xf32, #tpu.memory_space<vmem>>, vector<3x30xf32>
    %cst_50 = arith.constant dense<0.000000e+00> : vector<3x196xf32>
    %85 = tpu.matmul %84, %56, %cst_50 {dimension_numbers = #tpu.dot_dimension_numbers<[1], [0], [0], [1], [0, 0, 1, 1], [], []>} : vector<3x30xf32>, vector<30x196xf32>, vector<3x196xf32> -> vector<3x196xf32>
    %86 = vector.broadcast %83 : vector<3x1xf32> to vector<3x196xf32>
    %87 = arith.addf %85, %86 : vector<3x196xf32>
    %cst_51 = arith.constant 0.000000e+00 : f32
    %88 = vector.broadcast %cst_51 : f32 to vector<3x196xf32>
    %89 = arith.maximumf %87, %88 : vector<3x196xf32>
    %90 = arith.index_cast %c1_i32 : i32 to index
    %c0_52 = arith.constant 0 : index
    %c0_53 = arith.constant 0 : index
    %91 = vector.load %arg14[%90, %c0_52, %c0_53] : memref<2x3x196xf32, #tpu.memory_space<vmem>>, vector<1x3x196xf32>
    %92 = vector.shape_cast %91 : vector<1x3x196xf32> to vector<3x196xf32>
    %93 = vector.shape_cast %89 : vector<3x196xf32> to vector<1x3x196xf32>
    tpu.vector_store %arg14[%90, %c0_52, %c0_53], %93 {strides = array<i32>} : memref<2x3x196xf32, #tpu.memory_space<vmem>>, vector<1x3x196xf32>,
    %c2_i32 = arith.constant 2 : i32
    %c0_54 = arith.constant 0 : index
    %c0_55 = arith.constant 0 : index
    %94 = vector.load %arg9[%c0_54, %c0_55] : memref<1x60xf32, #tpu.memory_space<vmem>>, vector<1x60xf32>
    %c0_56 = arith.constant 0 : index
    %c0_57 = arith.constant 0 : index
    %c0_58 = arith.constant 0 : index
    %95 = vector.load %arg14[%c0_56, %c0_57, %c0_58] : memref<2x3x196xf32, #tpu.memory_space<vmem>>, vector<2x1x196xf32>
    %96 = vector.shape_cast %95 : vector<2x1x196xf32> to vector<2x196xf32>
    %c0_59 = arith.constant 0 : index
    %c0_60 = arith.constant 0 : index
    %c0_61 = arith.constant 0 : index
    %97 = vector.load %arg8[%c0_59, %c0_60, %c0_61] : memref<3x196x60xf32, #tpu.memory_space<vmem>>, vector<1x196x60xf32>
    %98 = vector.shape_cast %97 : vector<1x196x60xf32> to vector<196x60xf32>
    %cst_62 = arith.constant dense<0.000000e+00> : vector<2x60xf32>
    %99 = tpu.matmul %96, %98, %cst_62 {dimension_numbers = #tpu.dot_dimension_numbers<[1], [0], [0], [1], [0, 0, 1, 1], [], []>} : vector<2x196xf32>, vector<196x60xf32>, vector<2x60xf32> -> vector<2x60xf32>
    %100 = vector.broadcast %94 : vector<1x60xf32> to vector<2x60xf32>
    %101 = arith.addf %100, %99 : vector<2x60xf32>
    %c0_63 = arith.constant 0 : index
    %c1 = arith.constant 1 : index
    %c0_64 = arith.constant 0 : index
    %102 = vector.load %arg14[%c0_63, %c1, %c0_64] : memref<2x3x196xf32, #tpu.memory_space<vmem>>, vector<2x1x196xf32>
    %103 = vector.shape_cast %102 : vector<2x1x196xf32> to vector<2x196xf32>
    %c1_65 = arith.constant 1 : index
    %c0_66 = arith.constant 0 : index
    %c0_67 = arith.constant 0 : index
    %104 = vector.load %arg8[%c1_65, %c0_66, %c0_67] : memref<3x196x60xf32, #tpu.memory_space<vmem>>, vector<1x196x60xf32>
    %105 = vector.shape_cast %104 : vector<1x196x60xf32> to vector<196x60xf32>
    %cst_68 = arith.constant dense<0.000000e+00> : vector<2x60xf32>
    %106 = tpu.matmul %103, %105, %cst_68 {dimension_numbers = #tpu.dot_dimension_numbers<[1], [0], [0], [1], [0, 0, 1, 1], [], []>} : vector<2x196xf32>, vector<196x60xf32>, vector<2x60xf32> -> vector<2x60xf32>
    %107 = arith.addf %101, %106 : vector<2x60xf32>
    %c0_69 = arith.constant 0 : index
    %c2 = arith.constant 2 : index
    %c0_70 = arith.constant 0 : index
    %108 = vector.load %arg14[%c0_69, %c2, %c0_70] : memref<2x3x196xf32, #tpu.memory_space<vmem>>, vector<2x1x196xf32>
    %109 = vector.shape_cast %108 : vector<2x1x196xf32> to vector<2x196xf32>
    %c2_71 = arith.constant 2 : index
    %c0_72 = arith.constant 0 : index
    %c0_73 = arith.constant 0 : index
    %110 = vector.load %arg8[%c2_71, %c0_72, %c0_73] : memref<3x196x60xf32, #tpu.memory_space<vmem>>, vector<1x196x60xf32>
    %111 = vector.shape_cast %110 : vector<1x196x60xf32> to vector<196x60xf32>
    %cst_74 = arith.constant dense<0.000000e+00> : vector<2x60xf32>
    %112 = tpu.matmul %109, %111, %cst_74 {dimension_numbers = #tpu.dot_dimension_numbers<[1], [0], [0], [1], [0, 0, 1, 1], [], []>} : vector<2x196xf32>, vector<196x60xf32>, vector<2x60xf32> -> vector<2x60xf32>
    %113 = arith.addf %107, %112 : vector<2x60xf32>
    %cst_75 = arith.constant 0.000000e+00 : f32
    %114 = vector.broadcast %cst_75 : f32 to vector<2x60xf32>
    %115 = arith.maximumf %113, %114 : vector<2x60xf32>
    %c0_76 = arith.constant 0 : index
    %c0_77 = arith.constant 0 : index
    %116 = vector.load %arg10[%c0_76, %c0_77] : memref<60x30xf32, #tpu.memory_space<vmem>>, vector<60x30xf32>
    %cst_78 = arith.constant dense<0.000000e+00> : vector<2x30xf32>
    %117 = tpu.matmul %115, %116, %cst_78 {dimension_numbers = #tpu.dot_dimension_numbers<[1], [0], [0], [1], [0, 0, 1, 1], [], []>} : vector<2x60xf32>, vector<60x30xf32>, vector<2x30xf32> -> vector<2x30xf32>
    %c0_79 = arith.constant 0 : index
    %c0_80 = arith.constant 0 : index
    %118 = vector.load %arg11[%c0_79, %c0_80] : memref<1x30xf32, #tpu.memory_space<vmem>>, vector<1x30xf32>
    %119 = vector.broadcast %118 : vector<1x30xf32> to vector<2x30xf32>
    %120 = arith.addf %117, %119 : vector<2x30xf32>
    %c0_81 = arith.constant 0 : index
    %c0_82 = arith.constant 0 : index
    %c0_83 = arith.constant 0 : index
    %121 = vector.load %arg13[%c0_81, %c0_82, %c0_83] : memref<2x1x30xf32, #tpu.memory_space<vmem>>, vector<2x1x30xf32>
    %122 = vector.shape_cast %121 : vector<2x1x30xf32> to vector<2x30xf32>
    %123 = vector.shape_cast %120 : vector<2x30xf32> to vector<2x1x30xf32>
    tpu.vector_store %arg13[%c0_81, %c0_82, %c0_83], %123 {strides = array<i32>} : memref<2x1x30xf32, #tpu.memory_space<vmem>>, vector<2x1x30xf32>,
    return
  }
  func.func @transform_0(%arg0: i32) -> (i32, i32, i32) {
    %c0_i32 = arith.constant 0 : i32
    %c0_i32_0 = arith.constant 0 : i32
    %c0_i32_1 = arith.constant 0 : i32
    return %arg0, %c0_i32, %c0_i32_0 : i32, i32, i32
  }
  func.func @transform_1(%arg0: i32) -> (i32, i32, i32) {
    %c0_i32 = arith.constant 0 : i32
    %c0_i32_0 = arith.constant 0 : i32
    %c0_i32_1 = arith.constant 0 : i32
    return %arg0, %c0_i32, %c0_i32_0 : i32, i32, i32
  }
  func.func @transform_2(%arg0: i32) -> (i32, i32) {
    %c0_i32 = arith.constant 0 : i32
    %c0_i32_0 = arith.constant 0 : i32
    %c0_i32_1 = arith.constant 0 : i32
    return %c0_i32, %c0_i32_0 : i32, i32
  }
  func.func @transform_3(%arg0: i32) -> (i32, i32) {
    %c0_i32 = arith.constant 0 : i32
    %c0_i32_0 = arith.constant 0 : i32
    %c0_i32_1 = arith.constant 0 : i32
    return %c0_i32, %c0_i32_0 : i32, i32
  }
  func.func @transform_4(%arg0: i32) -> (i32, i32) {
    %c0_i32 = arith.constant 0 : i32
    %c0_i32_0 = arith.constant 0 : i32
    %c0_i32_1 = arith.constant 0 : i32
    return %c0_i32, %c0_i32_0 : i32, i32
  }
  func.func @transform_5(%arg0: i32) -> (i32, i32) {
    %c0_i32 = arith.constant 0 : i32
    %c0_i32_0 = arith.constant 0 : i32
    %c0_i32_1 = arith.constant 0 : i32
    return %c0_i32, %c0_i32_0 : i32, i32
  }
  func.func @transform_6(%arg0: i32) -> (i32, i32) {
    %c0_i32 = arith.constant 0 : i32
    %c0_i32_0 = arith.constant 0 : i32
    %c0_i32_1 = arith.constant 0 : i32
    return %c0_i32, %c0_i32_0 : i32, i32
  }
  func.func @transform_7(%arg0: i32) -> (i32, i32, i32) {
    %c0_i32 = arith.constant 0 : i32
    %c0_i32_0 = arith.constant 0 : i32
    %c0_i32_1 = arith.constant 0 : i32
    %c0_i32_2 = arith.constant 0 : i32
    return %c0_i32, %c0_i32_0, %c0_i32_1 : i32, i32, i32
  }
  func.func @transform_8(%arg0: i32) -> (i32, i32) {
    %c0_i32 = arith.constant 0 : i32
    %c0_i32_0 = arith.constant 0 : i32
    %c0_i32_1 = arith.constant 0 : i32
    return %c0_i32, %c0_i32_0 : i32, i32
  }
  func.func @transform_9(%arg0: i32) -> (i32, i32) {
    %c0_i32 = arith.constant 0 : i32
    %c0_i32_0 = arith.constant 0 : i32
    %c0_i32_1 = arith.constant 0 : i32
    return %c0_i32, %c0_i32_0 : i32, i32
  }
  func.func @transform_10(%arg0: i32) -> (i32, i32) {
    %c0_i32 = arith.constant 0 : i32
    %c0_i32_0 = arith.constant 0 : i32
    %c0_i32_1 = arith.constant 0 : i32
    return %c0_i32, %c0_i32_0 : i32, i32
  }
  func.func @transform_11(%arg0: i32) -> (i32, i32, i32) {
    %c0_i32 = arith.constant 0 : i32
    %c0_i32_0 = arith.constant 0 : i32
    %c0_i32_1 = arith.constant 0 : i32
    return %arg0, %c0_i32, %c0_i32_0 : i32, i32, i32
  }
  func.func @transform_12(%arg0: i32) -> (i32, i32, i32) {
    %c0_i32 = arith.constant 0 : i32
    %c0_i32_0 = arith.constant 0 : i32
    %c0_i32_1 = arith.constant 0 : i32
    return %arg0, %c0_i32, %c0_i32_0 : i32, i32, i32
  }
}

</mosaic_0001>

<llo_original>
// kernel: tpu_custom_call.1
$region0: #{tpu_custom_call.1}
  #allocation0 [shape = 'u32[]', space=smem, size = 0x4, offset = 0x4, fixed_abs, tag = 'smem constant byte address 0x4 - core index']
  #allocation1 [shape = 'u32[72,128]{1,0:T(1,128)}', space=vmem, size = 0x9000, scoped, tag = 'internal scratch']
  #allocation2 [shape = 'f32[2,3,196]{2,1,0:T(4,128)}', space=vmem, size = 0x2000, scoped, tag = 'scratch operand']
  %s0 = inlined_call_operand.vmem [shape: f32[2,512,196], index: 0, kind: input, shape index: {}]
  %s1 = inlined_call_operand.vmem [shape: f32[2,33,1], index: 1, kind: input, shape index: {}]
  %s2 = inlined_call_operand.vmem [shape: f32[30,512], index: 2, kind: input, shape index: {}]
  %s3 = inlined_call_operand.vmem [shape: f32[30,1], index: 3, kind: input, shape index: {}]
  %s4 = inlined_call_operand.vmem [shape: f32[30,30], index: 4, kind: input, shape index: {}]
  %s5 = inlined_call_operand.vmem [shape: f32[3,30], index: 5, kind: input, shape index: {}]
  %s6 = inlined_call_operand.vmem [shape: f32[3,30], index: 6, kind: input, shape index: {}]
  %s7 = inlined_call_operand.vmem [shape: f32[3,196,60], index: 7, kind: input, shape index: {}]
  %s8 = inlined_call_operand.vmem [shape: f32[1,60], index: 8, kind: input, shape index: {}]
  %s9 = inlined_call_operand.vmem [shape: f32[60,30], index: 9, kind: input, shape index: {}]
  %s10 = inlined_call_operand.vmem [shape: f32[1,30], index: 10, kind: input, shape index: {}]
  %s11 = inlined_call_operand.vmem [shape: f32[2,30,1], index: 11, kind: output, shape index: {0}]
  %s12 = inlined_call_operand.hbm [shape: f32[2,1,30], index: 12, kind: output, shape index: {1}]
  %13 = xla_tuple %s11, %s12
  %s14 = sld [smem:[#allocation0]]
  $region62: #{tpu_custom_call.1} parent=0
    _
  %s16 = ssub.s32 1, %s14
  %s17 = scalar_select 0, %s16, %s14
  $region1: #{tpu_custom_call.1} parent=0
    #allocation3 [shape = 'u8[1024]{0}', space=vmem, size = 0x400, scoped, tag = 'output window, operand 1, single buffered']
    #allocation4 [shape = 's32[1]{0}', space=sflag, size = 0x4, scoped, tag = 'scoped memory for tpu_custom_call.1']
    %18 = vsyncpa [#allocation4], 0
    // Predicated region
    $region2: #{tpu_custom_call.1} parent=1 // pred_check
      _
    $region3: #{tpu_custom_call.1} parent=1 // pred_check_branch
      %20 = sbr.rel (0) target = $region5
    $region4: #{tpu_custom_call.1} parent=1 // pred_region
      _
    $region5: #{tpu_custom_call.1} parent=1 // pred_fallthru
      _
    // Predicated region
    $region6: #{tpu_custom_call.1} parent=1 // pred_check
      _
    $region7: #{tpu_custom_call.1} parent=1 // pred_check_branch
      %22 = sbr.rel (0) target = $region9
    $region8: #{tpu_custom_call.1} parent=1 // pred_region
      _
    $region9: #{tpu_custom_call.1} parent=1 // pred_fallthru
      _
    // Predicated region
    $region10: #{tpu_custom_call.1} parent=1 // pred_check
      _
    $region11: #{tpu_custom_call.1} parent=1 // pred_check_branch
      %24 = sbr.rel (0) target = $region13
    $region12: #{tpu_custom_call.1} parent=1 // pred_region
      _
    $region13: #{tpu_custom_call.1} parent=1 // pred_fallthru
      _
    // Predicated region
    $region14: #{tpu_custom_call.1} parent=1 // pred_check
      _
    $region15: #{tpu_custom_call.1} parent=1 // pred_check_branch
      %26 = sbr.rel (0) target = $region17
    $region16: #{tpu_custom_call.1} parent=1 // pred_region
      _
    $region17: #{tpu_custom_call.1} parent=1 // pred_fallthru
      _
    // Predicated region
    $region18: #{tpu_custom_call.1} parent=1 // pred_check
      _
    $region19: #{tpu_custom_call.1} parent=1 // pred_check_branch
      %28 = sbr.rel (0) target = $region21
    $region20: #{tpu_custom_call.1} parent=1 // pred_region
      _
    $region21: #{tpu_custom_call.1} parent=1 // pred_fallthru
      _
    // Predicated region
    $region22: #{tpu_custom_call.1} parent=1 // pred_check
      _
    $region23: #{tpu_custom_call.1} parent=1 // pred_check_branch
      %30 = sbr.rel (0) target = $region25
    $region24: #{tpu_custom_call.1} parent=1 // pred_region
      _
    $region25: #{tpu_custom_call.1} parent=1 // pred_fallthru
      _
    // Predicated region
    $region26: #{tpu_custom_call.1} parent=1 // pred_check
      _
    $region27: #{tpu_custom_call.1} parent=1 // pred_check_branch
      %32 = sbr.rel (0) target = $region29
    $region28: #{tpu_custom_call.1} parent=1 // pred_region
      _
    $region29: #{tpu_custom_call.1} parent=1 // pred_fallthru
      _
    // Predicated region
    $region30: #{tpu_custom_call.1} parent=1 // pred_check
      _
    $region31: #{tpu_custom_call.1} parent=1 // pred_check_branch
      %34 = sbr.rel (0) target = $region33
    $region32: #{tpu_custom_call.1} parent=1 // pred_region
      _
    $region33: #{tpu_custom_call.1} parent=1 // pred_fallthru
      _
    // Predicated region
    $region34: #{tpu_custom_call.1} parent=1 // pred_check
      _
    $region35: #{tpu_custom_call.1} parent=1 // pred_check_branch
      %36 = sbr.rel (0) target = $region37
    $region36: #{tpu_custom_call.1} parent=1 // pred_region
      _
    $region37: #{tpu_custom_call.1} parent=1 // pred_fallthru
      _
    // Predicated region
    $region38: #{tpu_custom_call.1} parent=1 // pred_check
      _
    $region39: #{tpu_custom_call.1} parent=1 // pred_check_branch
      %38 = sbr.rel (0) target = $region41
    $region40: #{tpu_custom_call.1} parent=1 // pred_region
      _
    $region41: #{tpu_custom_call.1} parent=1 // pred_fallthru
      _
    // Predicated region
    $region42: #{tpu_custom_call.1} parent=1 // pred_check
      _
    $region43: #{tpu_custom_call.1} parent=1 // pred_check_branch
      %40 = sbr.rel (0) target = $region45
    $region44: #{tpu_custom_call.1} parent=1 // pred_region
      _
    $region45: #{tpu_custom_call.1} parent=1 // pred_fallthru
      _
    %v41 = vld [vmem:[%s2] sm:$0xff]
    %v42 = vld [vmem:[%s2 + $0x8] sm:$0xff]
    %v43 = vld [vmem:[%s2 + $0x10] sm:$0xff]
    %v44 = vld [vmem:[%s2 + $0x18] sm:$0xff]
    %v45 = vld [vmem:[%s2 + $0x20] sm:$0xff]
    %v46 = vld [vmem:[%s2 + $0x28] sm:$0xff]
    %v47 = vld [vmem:[%s2 + $0x30] sm:$0xff]
    %v48 = vld [vmem:[%s2 + $0x38] sm:$0xff]
    %v49 = vld [vmem:[%s2 + $0x40] sm:$0xff]
    %v50 = vld [vmem:[%s2 + $0x48] sm:$0xff]
    %v51 = vld [vmem:[%s2 + $0x50] sm:$0xff]
    %v52 = vld [vmem:[%s2 + $0x58] sm:$0xff]
    %v53 = vld [vmem:[%s2 + $0x60] sm:$0x3f]
    %v54 = vld [vmem:[%s2 + $0x68] sm:$0x3f]
    %v55 = vld [vmem:[%s2 + $0x70] sm:$0x3f]
    %v56 = vld [vmem:[%s2 + $0x78] sm:$0x3f]
    %v57 = vld [vmem:[%s0] sm:$0xff]
    %v58 = vld [vmem:[%s0 + $0x8] sm:$0xff]
    %v59 = vld [vmem:[%s0 + $0x10] sm:$0xff]
    %v60 = vld [vmem:[%s0 + $0x18] sm:$0xff]
    %v61 = vld [vmem:[%s0 + $0x20] sm:$0xff]
    %v62 = vld [vmem:[%s0 + $0x28] sm:$0xff]
    %v63 = vld [vmem:[%s0 + $0x30] sm:$0xff]
    %v64 = vld [vmem:[%s0 + $0x38] sm:$0xff]
    %v65 = vld [vmem:[%s0 + $0x40] sm:$0xff]
    %v66 = vld [vmem:[%s0 + $0x48] sm:$0xff]
    %v67 = vld [vmem:[%s0 + $0x50] sm:$0xff]
    %v68 = vld [vmem:[%s0 + $0x58] sm:$0xff]
    %v69 = vld [vmem:[%s0 + $0x60] sm:$0xff]
    %v70 = vld [vmem:[%s0 + $0x68] sm:$0xff]
    %v71 = vld [vmem:[%s0 + $0x70] sm:$0xff]
    %v72 = vld [vmem:[%s0 + $0x78] sm:$0xff]
    %v73 = vld [vmem:[%s0 + $0x80] sm:$0xff]
    %v74 = vld [vmem:[%s0 + $0x88] sm:$0xff]
    %v75 = vld [vmem:[%s0 + $0x90] sm:$0xff]
    %v76 = vld [vmem:[%s0 + $0x98] sm:$0xff]
    %v77 = vld [vmem:[%s0 + $0xa0] sm:$0xff]
    %v78 = vld [vmem:[%s0 + $0xa8] sm:$0xff]
    %v79 = vld [vmem:[%s0 + $0xb0] sm:$0xff]
    %v80 = vld [vmem:[%s0 + $0xb8] sm:$0xff]
    %v81 = vld [vmem:[%s0 + $0xc0] sm:$0xff]
    %v82 = vld [vmem:[%s0 + $0xc8] sm:$0xff]
    %v83 = vld [vmem:[%s0 + $0xd0] sm:$0xff]
    %v84 = vld [vmem:[%s0 + $0xd8] sm:$0xff]
    %v85 = vld [vmem:[%s0 + $0xe0] sm:$0xff]
    %v86 = vld [vmem:[%s0 + $0xe8] sm:$0xff]
    %v87 = vld [vmem:[%s0 + $0xf0] sm:$0xff]
    %v88 = vld [vmem:[%s0 + $0xf8] sm:$0xff]
    %v89 = vld [vmem:[%s0 + $0x100] sm:$0xff]
    %v90 = vld [vmem:[%s0 + $0x108] sm:$0xff]
    %v91 = vld [vmem:[%s0 + $0x110] sm:$0xff]
    %v92 = vld [vmem:[%s0 + $0x118] sm:$0xff]
    %v93 = vld [vmem:[%s0 + $0x120] sm:$0xff]
    %v94 = vld [vmem:[%s0 + $0x128] sm:$0xff]
    %v95 = vld [vmem:[%s0 + $0x130] sm:$0xff]
    %v96 = vld [vmem:[%s0 + $0x138] sm:$0xff]
    %v97 = vld [vmem:[%s0 + $0x140] sm:$0xff]
    %v98 = vld [vmem:[%s0 + $0x148] sm:$0xff]
    %v99 = vld [vmem:[%s0 + $0x150] sm:$0xff]
    %v100 = vld [vmem:[%s0 + $0x158] sm:$0xff]
    %v101 = vld [vmem:[%s0 + $0x160] sm:$0xff]
    %v102 = vld [vmem:[%s0 + $0x168] sm:$0xff]
    %v103 = vld [vmem:[%s0 + $0x170] sm:$0xff]
    %v104 = vld [vmem:[%s0 + $0x178] sm:$0xff]
    %v105 = vld [vmem:[%s0 + $0x180] sm:$0xff]
    %v106 = vld [vmem:[%s0 + $0x188] sm:$0xff]
    %v107 = vld [vmem:[%s0 + $0x190] sm:$0xff]
    %v108 = vld [vmem:[%s0 + $0x198] sm:$0xff]
    %v109 = vld [vmem:[%s0 + $0x1a0] sm:$0xff]
    %v110 = vld [vmem:[%s0 + $0x1a8] sm:$0xff]
    %v111 = vld [vmem:[%s0 + $0x1b0] sm:$0xff]
    %v112 = vld [vmem:[%s0 + $0x1b8] sm:$0xff]
    %v113 = vld [vmem:[%s0 + $0x1c0] sm:$0xff]
    %v114 = vld [vmem:[%s0 + $0x1c8] sm:$0xff]
    %v115 = vld [vmem:[%s0 + $0x1d0] sm:$0xff]
    %v116 = vld [vmem:[%s0 + $0x1d8] sm:$0xff]
    %v117 = vld [vmem:[%s0 + $0x1e0] sm:$0xff]
    %v118 = vld [vmem:[%s0 + $0x1e8] sm:$0xff]
    %v119 = vld [vmem:[%s0 + $0x1f0] sm:$0xff]
    %v120 = vld [vmem:[%s0 + $0x1f8] sm:$0xff]
    %v121 = vld [vmem:[%s0 + $0x200] sm:$0xff]
    %v122 = vld [vmem:[%s0 + $0x208] sm:$0xff]
    %v123 = vld [vmem:[%s0 + $0x210] sm:$0xff]
    %v124 = vld [vmem:[%s0 + $0x218] sm:$0xff]
    %v125 = vld [vmem:[%s0 + $0x220] sm:$0xff]
    %v126 = vld [vmem:[%s0 + $0x228] sm:$0xff]
    %v127 = vld [vmem:[%s0 + $0x230] sm:$0xff]
    %v128 = vld [vmem:[%s0 + $0x238] sm:$0xff]
    %v129 = vld [vmem:[%s0 + $0x240] sm:$0xff]
    %v130 = vld [vmem:[%s0 + $0x248] sm:$0xff]
    %v131 = vld [vmem:[%s0 + $0x250] sm:$0xff]
    %v132 = vld [vmem:[%s0 + $0x258] sm:$0xff]
    %v133 = vld [vmem:[%s0 + $0x260] sm:$0xff]
    %v134 = vld [vmem:[%s0 + $0x268] sm:$0xff]
    %v135 = vld [vmem:[%s0 + $0x270] sm:$0xff]
    %v136 = vld [vmem:[%s0 + $0x278] sm:$0xff]
    %v137 = vld [vmem:[%s0 + $0x280] sm:$0xff]
    %v138 = vld [vmem:[%s0 + $0x288] sm:$0xff]
    %v139 = vld [vmem:[%s0 + $0x290] sm:$0xff]
    %v140 = vld [vmem:[%s0 + $0x298] sm:$0xff]
    %v141 = vld [vmem:[%s0 + $0x2a0] sm:$0xff]
    %v142 = vld [vmem:[%s0 + $0x2a8] sm:$0xff]
    %v143 = vld [vmem:[%s0 + $0x2b0] sm:$0xff]
    %v144 = vld [vmem:[%s0 + $0x2b8] sm:$0xff]
    %v145 = vld [vmem:[%s0 + $0x2c0] sm:$0xff]
    %v146 = vld [vmem:[%s0 + $0x2c8] sm:$0xff]
    %v147 = vld [vmem:[%s0 + $0x2d0] sm:$0xff]
    %v148 = vld [vmem:[%s0 + $0x2d8] sm:$0xff]
    %v149 = vld [vmem:[%s0 + $0x2e0] sm:$0xff]
    %v150 = vld [vmem:[%s0 + $0x2e8] sm:$0xff]
    %v151 = vld [vmem:[%s0 + $0x2f0] sm:$0xff]
    %v152 = vld [vmem:[%s0 + $0x2f8] sm:$0xff]
    %v153 = vld [vmem:[%s0 + $0x300] sm:$0xff]
    %v154 = vld [vmem:[%s0 + $0x308] sm:$0xff]
    %v155 = vld [vmem:[%s0 + $0x310] sm:$0xff]
    %v156 = vld [vmem:[%s0 + $0x318] sm:$0xff]
    %v157 = vld [vmem:[%s0 + $0x320] sm:$0xff]
    %v158 = vld [vmem:[%s0 + $0x328] sm:$0xff]
    %v159 = vld [vmem:[%s0 + $0x330] sm:$0xff]
    %v160 = vld [vmem:[%s0 + $0x338] sm:$0xff]
    %v161 = vld [vmem:[%s0 + $0x340] sm:$0xff]
    %v162 = vld [vmem:[%s0 + $0x348] sm:$0xff]
    %v163 = vld [vmem:[%s0 + $0x350] sm:$0xff]
    %v164 = vld [vmem:[%s0 + $0x358] sm:$0xff]
    %v165 = vld [vmem:[%s0 + $0x360] sm:$0xff]
    %v166 = vld [vmem:[%s0 + $0x368] sm:$0xff]
    %v167 = vld [vmem:[%s0 + $0x370] sm:$0xff]
    %v168 = vld [vmem:[%s0 + $0x378] sm:$0xff]
    %v169 = vld [vmem:[%s0 + $0x380] sm:$0xff]
    %v170 = vld [vmem:[%s0 + $0x388] sm:$0xff]
    %v171 = vld [vmem:[%s0 + $0x390] sm:$0xff]
    %v172 = vld [vmem:[%s0 + $0x398] sm:$0xff]
    %v173 = vld [vmem:[%s0 + $0x3a0] sm:$0xff]
    %v174 = vld [vmem:[%s0 + $0x3a8] sm:$0xff]
    %v175 = vld [vmem:[%s0 + $0x3b0] sm:$0xff]
    %v176 = vld [vmem:[%s0 + $0x3b8] sm:$0xff]
    %v177 = vld [vmem:[%s0 + $0x3c0] sm:$0xff]
    %v178 = vld [vmem:[%s0 + $0x3c8] sm:$0xff]
    %v179 = vld [vmem:[%s0 + $0x3d0] sm:$0xff]
    %v180 = vld [vmem:[%s0 + $0x3d8] sm:$0xff]
    %v181 = vld [vmem:[%s0 + $0x3e0] sm:$0xff]
    %v182 = vld [vmem:[%s0 + $0x3e8] sm:$0xff]
    %v183 = vld [vmem:[%s0 + $0x3f0] sm:$0xff]
    %v184 = vld [vmem:[%s0 + $0x3f8] sm:$0xff]
    %v185 = vld [vmem:[%s3] sm:$0xff]
    %v186 = vld [vmem:[%s3 + $0x8] sm:$0xff]
    %v187 = vld [vmem:[%s3 + $0x10] sm:$0xff]
    %v188 = vld [vmem:[%s3 + $0x18] sm:$0x3f]
    %190 = vset.pattern.permute.xlu0 0
    %191 = vperm.xlu0 %190, %v185
    %v192 = vpop.permute.xlu0 %191
    %195 = vset.pattern.permute.xlu0 0
    %196 = vperm.xlu0 %195, %v186
    %v197 = vpop.permute.xlu0 %196
    %200 = vset.pattern.permute.xlu0 0
    %201 = vperm.xlu0 %200, %v187
    %v202 = vpop.permute.xlu0 %201
    %205 = vset.pattern.permute.xlu0 0
    %206 = vperm.xlu0 %205, %v188
    %v207 = vpop.permute.xlu0 %206
    %209 = vmatpush.msra.mxu0 %v87
    %210 = vmatpush.msra.mxu0 %v85
    %211 = vmatpush.msra.mxu0 %v83
    %212 = vmatpush.msra.mxu0 %v81
    %213 = vmatpush.msra.mxu0 %v79
    %214 = vmatpush.msra.mxu0 %v77
    %215 = vmatpush.msra.mxu0 %v75
    %216 = vmatpush.msra.mxu0 %v73
    %217 = vmatpush.msra.mxu0 %v71
    %218 = vmatpush.msra.mxu0 %v69
    %219 = vmatpush.msra.mxu0 %v67
    %220 = vmatpush.msra.mxu0 %v65
    %221 = vmatpush.msra.mxu0 %v63
    %222 = vmatpush.msra.mxu0 %v61
    %223 = vmatpush.msra.mxu0 %v59
    %224 = vmatpush.msra.mxu0 %v57
    %225 = vmatmul.f32.gmra.mxu0 %v41
    %v226 = vpop.f32.mrf.mxu0
    %v227 = vadd.f32 %v192, %v226
    %228 = vmatmul.f32.gmra.mxu0 %v45
    %v229 = vpop.f32.mrf.mxu0
    %v230 = vadd.f32 %v197, %v229
    %231 = vmatmul.f32.gmra.mxu0 %v49
    %v232 = vpop.f32.mrf.mxu0
    %v233 = vadd.f32 %v202, %v232
    %234 = vmatmul.f32.gmra.mxu0 %v53
    %v235 = vpop.f32.mrf.mxu0
    %v236 = vadd.f32 %v207, %v235
    %237 = vdwg.mxu0
    %238 = vmatpush.msra.mxu0 %v119
    %239 = vmatpush.msra.mxu0 %v117
    %240 = vmatpush.msra.mxu0 %v115
    %241 = vmatpush.msra.mxu0 %v113
    %242 = vmatpush.msra.mxu0 %v111
    %243 = vmatpush.msra.mxu0 %v109
    %244 = vmatpush.msra.mxu0 %v107
    %245 = vmatpush.msra.mxu0 %v105
    %246 = vmatpush.msra.mxu0 %v103
    %247 = vmatpush.msra.mxu0 %v101
    %248 = vmatpush.msra.mxu0 %v99
    %249 = vmatpush.msra.mxu0 %v97
    %250 = vmatpush.msra.mxu0 %v95
    %251 = vmatpush.msra.mxu0 %v93
    %252 = vmatpush.msra.mxu0 %v91
    %253 = vmatpush.msra.mxu0 %v89
    %254 = vmatmul.f32.gmra.mxu0 %v42
    %v255 = vpop.f32.mrf.mxu0
    %v256 = vadd.f32 %v227, %v255
    %257 = vmatmul.f32.gmra.mxu0 %v46
    %v258 = vpop.f32.mrf.mxu0
    %v259 = vadd.f32 %v230, %v258
    %260 = vmatmul.f32.gmra.mxu0 %v50
    %v261 = vpop.f32.mrf.mxu0
    %v262 = vadd.f32 %v233, %v261
    %263 = vmatmul.f32.gmra.mxu0 %v54
    %v264 = vpop.f32.mrf.mxu0
    %v265 = vadd.f32 %v236, %v264
    %266 = vdwg.mxu0
    %267 = vmatpush.msra.mxu0 %v151
    %268 = vmatpush.msra.mxu0 %v149
    %269 = vmatpush.msra.mxu0 %v147
    %270 = vmatpush.msra.mxu0 %v145
    %271 = vmatpush.msra.mxu0 %v143
    %272 = vmatpush.msra.mxu0 %v141
    %273 = vmatpush.msra.mxu0 %v139
    %274 = vmatpush.msra.mxu0 %v137
    %275 = vmatpush.msra.mxu0 %v135
    %276 = vmatpush.msra.mxu0 %v133
    %277 = vmatpush.msra.mxu0 %v131
    %278 = vmatpush.msra.mxu0 %v129
    %279 = vmatpush.msra.mxu0 %v127
    %280 = vmatpush.msra.mxu0 %v125
    %281 = vmatpush.msra.mxu0 %v123
    %282 = vmatpush.msra.mxu0 %v121
    %283 = vmatmul.f32.gmra.mxu0 %v43
    %v284 = vpop.f32.mrf.mxu0
    %v285 = vadd.f32 %v256, %v284
    %286 = vmatmul.f32.gmra.mxu0 %v47
    %v287 = vpop.f32.mrf.mxu0
    %v288 = vadd.f32 %v259, %v287
    %289 = vmatmul.f32.gmra.mxu0 %v51
    %v290 = vpop.f32.mrf.mxu0
    %v291 = vadd.f32 %v262, %v290
    %292 = vmatmul.f32.gmra.mxu0 %v55
    %v293 = vpop.f32.mrf.mxu0
    %v294 = vadd.f32 %v265, %v293
    %295 = vdwg.mxu0
    %296 = vmatpush.msra.mxu0 %v183
    %297 = vmatpush.msra.mxu0 %v181
    %298 = vmatpush.msra.mxu0 %v179
    %299 = vmatpush.msra.mxu0 %v177
    %300 = vmatpush.msra.mxu0 %v175
    %301 = vmatpush.msra.mxu0 %v173
    %302 = vmatpush.msra.mxu0 %v171
    %303 = vmatpush.msra.mxu0 %v169
    %304 = vmatpush.msra.mxu0 %v167
    %305 = vmatpush.msra.mxu0 %v165
    %306 = vmatpush.msra.mxu0 %v163
    %307 = vmatpush.msra.mxu0 %v161
    %308 = vmatpush.msra.mxu0 %v159
    %309 = vmatpush.msra.mxu0 %v157
    %310 = vmatpush.msra.mxu0 %v155
    %311 = vmatpush.msra.mxu0 %v153
    %312 = vmatmul.f32.gmra.mxu0 %v44
    %v313 = vpop.f32.mrf.mxu0
    %v314 = vadd.f32 %v285, %v313
    %315 = vmatmul.f32.gmra.mxu0 %v48
    %v316 = vpop.f32.mrf.mxu0
    %v317 = vadd.f32 %v288, %v316
    %318 = vmatmul.f32.gmra.mxu0 %v52
    %v319 = vpop.f32.mrf.mxu0
    %v320 = vadd.f32 %v291, %v319
    %321 = vmatmul.f32.gmra.mxu0 %v56
    %v322 = vpop.f32.mrf.mxu0
    %v323 = vadd.f32 %v294, %v322
    %324 = vdwg.mxu0
    %325 = vmatpush.msra.mxu0 %v88
    %326 = vmatpush.msra.mxu0 %v86
    %327 = vmatpush.msra.mxu0 %v84
    %328 = vmatpush.msra.mxu0 %v82
    %329 = vmatpush.msra.mxu0 %v80
    %330 = vmatpush.msra.mxu0 %v78
    %331 = vmatpush.msra.mxu0 %v76
    %332 = vmatpush.msra.mxu0 %v74
    %333 = vmatpush.msra.mxu0 %v72
    %334 = vmatpush.msra.mxu0 %v70
    %335 = vmatpush.msra.mxu0 %v68
    %336 = vmatpush.msra.mxu0 %v66
    %337 = vmatpush.msra.mxu0 %v64
    %338 = vmatpush.msra.mxu0 %v62
    %339 = vmatpush.msra.mxu0 %v60
    %340 = vmatpush.msra.mxu0 %v58
    %341 = vmatmul.f32.gmra.mxu0 %v41
    %v342 = vpop.f32.mrf.mxu0
    %v343 = vadd.f32 %v192, %v342
    %344 = vmatmul.f32.gmra.mxu0 %v45
    %v345 = vpop.f32.mrf.mxu0
    %v346 = vadd.f32 %v197, %v345
    %347 = vmatmul.f32.gmra.mxu0 %v49
    %v348 = vpop.f32.mrf.mxu0
    %v349 = vadd.f32 %v202, %v348
    %350 = vmatmul.f32.gmra.mxu0 %v53
    %v351 = vpop.f32.mrf.mxu0
    %v352 = vadd.f32 %v207, %v351
    %353 = vdwg.mxu0
    %354 = vmatpush.msra.mxu0 %v120
    %355 = vmatpush.msra.mxu0 %v118
    %356 = vmatpush.msra.mxu0 %v116
    %357 = vmatpush.msra.mxu0 %v114
    %358 = vmatpush.msra.mxu0 %v112
    %359 = vmatpush.msra.mxu0 %v110
    %360 = vmatpush.msra.mxu0 %v108
    %361 = vmatpush.msra.mxu0 %v106
    %362 = vmatpush.msra.mxu0 %v104
    %363 = vmatpush.msra.mxu0 %v102
    %364 = vmatpush.msra.mxu0 %v100
    %365 = vmatpush.msra.mxu0 %v98
    %366 = vmatpush.msra.mxu0 %v96
    %367 = vmatpush.msra.mxu0 %v94
    %368 = vmatpush.msra.mxu0 %v92
    %369 = vmatpush.msra.mxu0 %v90
    %370 = vmatmul.f32.gmra.mxu0 %v42
    %v371 = vpop.f32.mrf.mxu0
    %v372 = vadd.f32 %v343, %v371
    %373 = vmatmul.f32.gmra.mxu0 %v46
    %v374 = vpop.f32.mrf.mxu0
    %v375 = vadd.f32 %v346, %v374
    %376 = vmatmul.f32.gmra.mxu0 %v50
    %v377 = vpop.f32.mrf.mxu0
    %v378 = vadd.f32 %v349, %v377
    %379 = vmatmul.f32.gmra.mxu0 %v54
    %v380 = vpop.f32.mrf.mxu0
    %v381 = vadd.f32 %v352, %v380
    %382 = vdwg.mxu0
    %383 = vmatpush.msra.mxu0 %v152
    %384 = vmatpush.msra.mxu0 %v150
    %385 = vmatpush.msra.mxu0 %v148
    %386 = vmatpush.msra.mxu0 %v146
    %387 = vmatpush.msra.mxu0 %v144
    %388 = vmatpush.msra.mxu0 %v142
    %389 = vmatpush.msra.mxu0 %v140
    %390 = vmatpush.msra.mxu0 %v138
    %391 = vmatpush.msra.mxu0 %v136
    %392 = vmatpush.msra.mxu0 %v134
    %393 = vmatpush.msra.mxu0 %v132
    %394 = vmatpush.msra.mxu0 %v130
    %395 = vmatpush.msra.mxu0 %v128
    %396 = vmatpush.msra.mxu0 %v126
    %397 = vmatpush.msra.mxu0 %v124
    %398 = vmatpush.msra.mxu0 %v122
    %399 = vmatmul.f32.gmra.mxu0 %v43
    %v400 = vpop.f32.mrf.mxu0
    %v401 = vadd.f32 %v372, %v400
    %402 = vmatmul.f32.gmra.mxu0 %v47
    %v403 = vpop.f32.mrf.mxu0
    %v404 = vadd.f32 %v375, %v403
    %405 = vmatmul.f32.gmra.mxu0 %v51
    %v406 = vpop.f32.mrf.mxu0
    %v407 = vadd.f32 %v378, %v406
    %408 = vmatmul.f32.gmra.mxu0 %v55
    %v409 = vpop.f32.mrf.mxu0
    %v410 = vadd.f32 %v381, %v409
    %411 = vdwg.mxu0
    %412 = vmatpush.msra.mxu0 %v184
    %413 = vmatpush.msra.mxu0 %v182
    %414 = vmatpush.msra.mxu0 %v180
    %415 = vmatpush.msra.mxu0 %v178
    %416 = vmatpush.msra.mxu0 %v176
    %417 = vmatpush.msra.mxu0 %v174
    %418 = vmatpush.msra.mxu0 %v172
    %419 = vmatpush.msra.mxu0 %v170
    %420 = vmatpush.msra.mxu0 %v168
    %421 = vmatpush.msra.mxu0 %v166
    %422 = vmatpush.msra.mxu0 %v164
    %423 = vmatpush.msra.mxu0 %v162
    %424 = vmatpush.msra.mxu0 %v160
    %425 = vmatpush.msra.mxu0 %v158
    %426 = vmatpush.msra.mxu0 %v156
    %427 = vmatpush.msra.mxu0 %v154
    %428 = vmatmul.f32.gmra.mxu0 %v44
    %v429 = vpop.f32.mrf.mxu0
    %v430 = vadd.f32 %v401, %v429
    %431 = vmatmul.f32.gmra.mxu0 %v48
    %v432 = vpop.f32.mrf.mxu0
    %v433 = vadd.f32 %v404, %v432
    %434 = vmatmul.f32.gmra.mxu0 %v52
    %v435 = vpop.f32.mrf.mxu0
    %v436 = vadd.f32 %v407, %v435
    %437 = vmatmul.f32.gmra.mxu0 %v56
    %v438 = vpop.f32.mrf.mxu0
    %v439 = vadd.f32 %v410, %v438
    %440 = vdwg.mxu0
    %v441 = vmax.f32 %v314, 0.0
    %v442 = vmax.f32 %v430, 0.0
    %v443 = vmax.f32 %v317, 0.0
    %v444 = vmax.f32 %v433, 0.0
    %v445 = vmax.f32 %v320, 0.0
    %v446 = vmax.f32 %v436, 0.0
    %v447 = vmax.f32 %v323, 0.0
    %v448 = vmax.f32 %v439, 0.0
    %v449 = vld [vmem:[%s1] sm:$0xff]
    %v450 = vld [vmem:[%s1 + $0x8] sm:$0xff]
    %v451 = vld [vmem:[%s1 + $0x10] sm:$0xff]
    %v452 = vld [vmem:[%s1 + $0x18] sm:$0xff]
    %v453 = vld [vmem:[%s1 + $0x20] sm:$0x1]
    %v454 = vld [vmem:[%s4] sm:$0xff]
    %v455 = vld [vmem:[%s4 + $0x8] sm:$0xff]
    %v456 = vld [vmem:[%s4 + $0x10] sm:$0xff]
    %v457 = vld [vmem:[%s4 + $0x18] sm:$0x3f]
    %459 = vset.pattern.permute.xlu0 0
    %460 = vperm.xlu0 %459, %v449
    %v461 = vpop.permute.xlu0 %460
    %464 = vset.pattern.permute.xlu0 0
    %465 = vperm.xlu0 %464, %v450
    %v466 = vpop.permute.xlu0 %465
    %469 = vset.pattern.permute.xlu0 0
    %470 = vperm.xlu0 %469, %v451
    %v471 = vpop.permute.xlu0 %470
    %474 = vset.pattern.permute.xlu0 0
    %475 = vperm.xlu0 %474, %v452
    %v476 = vpop.permute.xlu0 %475
    %vm478 = vcmask 244736
    %v480 = vsel %vm478, %v454, 0
    %v483 = vsel %vm478, %v455, 0
    %v486 = vsel %vm478, %v456, 0
    %v489 = vsel %vm478, %v457, 0
    %vm491 = vcmask 1045504
    %v493 = vsel %vm491, %v447, 0
    %v496 = vsel %vm491, %v448, 0
    %498 = vmatpush.msra.mxu0 0.0
    %499 = vmatpush.msra.mxu0 0.0
    %500 = vmatpush.msra.mxu0 0.0
    %501 = vmatpush.msra.mxu0 0.0
    %502 = vmatpush.msra.mxu0 0.0
    %503 = vmatpush.msra.mxu0 0.0
    %504 = vmatpush.msra.mxu0 0.0
    %505 = vmatpush.msra.mxu0 0.0
    %506 = vmatpush.msra.mxu0 0.0
    %507 = vmatpush.msra.mxu0 0.0
    %508 = vmatpush.msra.mxu0 0.0
    %509 = vmatpush.msra.mxu0 0.0
    %510 = vmatpush.msra.mxu0 %v493
    %511 = vmatpush.msra.mxu0 %v445
    %512 = vmatpush.msra.mxu0 %v443
    %513 = vmatpush.msra.mxu0 %v441
    %514 = vmatmul.f32.gmra.mxu0 %v480
    %v515 = vpop.f32.mrf.mxu0
    %v516 = vadd.f32 %v461, %v515
    %517 = vmatmul.f32.gmra.mxu0 %v483
    %v518 = vpop.f32.mrf.mxu0
    %v519 = vadd.f32 %v466, %v518
    %520 = vmatmul.f32.gmra.mxu0 %v486
    %v521 = vpop.f32.mrf.mxu0
    %v522 = vadd.f32 %v471, %v521
    %523 = vmatmul.f32.gmra.mxu0 %v489
    %v524 = vpop.f32.mrf.mxu0
    %v525 = vadd.f32 %v476, %v524
    %526 = vdwg.mxu0
    %527 = vmatpush.msra.mxu0 0.0
    %528 = vmatpush.msra.mxu0 0.0
    %529 = vmatpush.msra.mxu0 0.0
    %530 = vmatpush.msra.mxu0 0.0
    %531 = vmatpush.msra.mxu0 0.0
    %532 = vmatpush.msra.mxu0 0.0
    %533 = vmatpush.msra.mxu0 0.0
    %534 = vmatpush.msra.mxu0 0.0
    %535 = vmatpush.msra.mxu0 0.0
    %536 = vmatpush.msra.mxu0 0.0
    %537 = vmatpush.msra.mxu0 0.0
    %538 = vmatpush.msra.mxu0 0.0
    %539 = vmatpush.msra.mxu0 %v496
    %540 = vmatpush.msra.mxu0 %v446
    %541 = vmatpush.msra.mxu0 %v444
    %542 = vmatpush.msra.mxu0 %v442
    %543 = vmatmul.f32.gmra.mxu0 %v480
    %v544 = vpop.f32.mrf.mxu0
    %v545 = vadd.f32 %v461, %v544
    %546 = vmatmul.f32.gmra.mxu0 %v483
    %v547 = vpop.f32.mrf.mxu0
    %v548 = vadd.f32 %v466, %v547
    %549 = vmatmul.f32.gmra.mxu0 %v486
    %v550 = vpop.f32.mrf.mxu0
    %v551 = vadd.f32 %v471, %v550
    %552 = vmatmul.f32.gmra.mxu0 %v489
    %v553 = vpop.f32.mrf.mxu0
    %v554 = vadd.f32 %v476, %v553
    %555 = vdwg.mxu0
    %v556 = vmax.f32 %v516, 0.0
    %v557 = vmax.f32 %v545, 0.0
    %v558 = vmax.f32 %v519, 0.0
    %v559 = vmax.f32 %v548, 0.0
    %v560 = vmax.f32 %v522, 0.0
    %v561 = vmax.f32 %v551, 0.0
    %v562 = vmax.f32 %v525, 0.0
    %v563 = vmax.f32 %v554, 0.0
    %vm564 = vcmask 556032
    %v565 = vsel %vm564, %v557, 0.0
    %v566 = vadd.f32 %v556, %v565
    %567 = vadd.xlane.f32.xlu0 %v566
    %v568 = vpop.xlane.xlu0 %567
    %v569 = vsel %vm564, %v559, 0.0
    %v570 = vadd.f32 %v558, %v569
    %571 = vadd.xlane.f32.xlu0 %v570
    %v572 = vpop.xlane.xlu0 %571
    %v573 = vsel %vm564, %v561, 0.0
    %v574 = vadd.f32 %v560, %v573
    %575 = vadd.xlane.f32.xlu0 %v574
    %v576 = vpop.xlane.xlu0 %575
    %v577 = vsel %vm491, %v562, 0.0
    %vm578 = vcmask 553984
    %v579 = vsel %vm578, %v563, 0.0
    %v580 = vadd.f32 %v577, %v579
    %581 = vadd.xlane.f32.xlu0 %v580
    %v582 = vpop.xlane.xlu0 %581
    %v583 = vrcp.pop 196.0
    %v584 = vmul.f32 196.0, %v583
    %v585 = vsub.f32 1.0, %v584
    %v586 = vmul.f32 %v583, %v585
    %v587 = vadd.f32 %v583, %v586
    %vm588 = vweird.f32 %v583
    %v589 = vsel %vm588, %v583, %v587
    %v590 = vmul.f32 %v568, %v589
    %v591 = vmul.f32 %v572, %v589
    %v592 = vmul.f32 %v576, %v589
    %v593 = vmul.f32 %v582, %v589
    %v594 = vxor.u32 %v590, 2147483648
    %v595 = vxor.u32 %v591, 2147483648
    %v596 = vxor.u32 %v592, 2147483648
    %v597 = vxor.u32 %v593, 2147483648
    %v598 = vmul.f32 %v594, 1.442695
    %v599 = vpow.pop %v598
    %v600 = vmul.f32 %v595, 1.442695
    %v601 = vpow.pop %v600
    %v602 = vmul.f32 %v596, 1.442695
    %v603 = vpow.pop %v602
    %v604 = vmul.f32 %v597, 1.442695
    %v605 = vpow.pop %v604
    %v606 = vadd.f32 %v599, 1.0
    %v607 = vadd.f32 %v601, 1.0
    %v608 = vadd.f32 %v603, 1.0
    %v609 = vadd.f32 %v605, 1.0
    %v610 = vrcp.pop %v606
    %v611 = vmul.f32 %v606, %v610
    %v612 = vsub.f32 1.0, %v611
    %v613 = vmul.f32 %v610, %v612
    %v614 = vadd.f32 %v610, %v613
    %vm615 = vweird.f32 %v606
    %vm616 = vweird.f32 %v610
    %vm617 = vmor %vm615, %vm616
    %v618 = vsel %vm617, %v610, %v614
    %v619 = vand.u32 2147483647, %v606
    %vm620 = vcmp.eq.f32.partialorder %v619, 8.507059e+37
    %v621 = vand.u32 %v606, 2147483648
    %v622 = vor.u32 1.1754944e-38, %v621
    %v623 = vsel %vm620, %v622, %v618
    %v624 = vmul.f32 1.0, %v623
    %v625 = vrcp.pop %v607
    %v626 = vmul.f32 %v607, %v625
    %v627 = vsub.f32 1.0, %v626
    %v628 = vmul.f32 %v625, %v627
    %v629 = vadd.f32 %v625, %v628
    %vm630 = vweird.f32 %v607
    %vm631 = vweird.f32 %v625
    %vm632 = vmor %vm630, %vm631
    %v633 = vsel %vm632, %v625, %v629
    %v634 = vand.u32 2147483647, %v607
    %vm635 = vcmp.eq.f32.partialorder %v634, 8.507059e+37
    %v636 = vand.u32 %v607, 2147483648
    %v637 = vor.u32 1.1754944e-38, %v636
    %v638 = vsel %vm635, %v637, %v633
    %v639 = vmul.f32 1.0, %v638
    %v640 = vrcp.pop %v608
    %v641 = vmul.f32 %v608, %v640
    %v642 = vsub.f32 1.0, %v641
    %v643 = vmul.f32 %v640, %v642
    %v644 = vadd.f32 %v640, %v643
    %vm645 = vweird.f32 %v608
    %vm646 = vweird.f32 %v640
    %vm647 = vmor %vm645, %vm646
    %v648 = vsel %vm647, %v640, %v644
    %v649 = vand.u32 2147483647, %v608
    %vm650 = vcmp.eq.f32.partialorder %v649, 8.507059e+37
    %v651 = vand.u32 %v608, 2147483648
    %v652 = vor.u32 1.1754944e-38, %v651
    %v653 = vsel %vm650, %v652, %v648
    %v654 = vmul.f32 1.0, %v653
    %v655 = vrcp.pop %v609
    %v656 = vmul.f32 %v609, %v655
    %v657 = vsub.f32 1.0, %v656
    %v658 = vmul.f32 %v655, %v657
    %v659 = vadd.f32 %v655, %v658
    %vm660 = vweird.f32 %v609
    %vm661 = vweird.f32 %v655
    %vm662 = vmor %vm660, %vm661
    %v663 = vsel %vm662, %v655, %v659
    %v664 = vand.u32 2147483647, %v609
    %vm665 = vcmp.eq.f32.partialorder %v664, 8.507059e+37
    %v666 = vand.u32 %v609, 2147483648
    %v667 = vor.u32 1.1754944e-38, %v666
    %v668 = vsel %vm665, %v667, %v663
    %v669 = vmul.f32 1.0, %v668
    %vm670 = vcmask 7168
    %671 = vst.msk [vmem:[%s11] sm:$0xff] %vm670, %v624
    %672 = vst.msk [vmem:[%s11 + $0x8] sm:$0xff] %vm670, %v639
    %673 = vst.msk [vmem:[%s11 + $0x10] sm:$0xff] %vm670, %v654
    %vm674 = vcmask 5120
    %675 = vst.msk [vmem:[%s11 + $0x18] sm:$0x3f] %vm674, %v669
    %v676 = vld [vmem:[%s5] sm:$0x7]
    %vm678 = vcmask 1041408
    %v679 = vrot.slane %v452, 6
    %v680 = vrot.slane %v453, 6
    %v681 = vsel %vm678, %v679, %v680
    %v684 = vsel %vm478, %v676, 0
    %v687 = vsel %vm491, %v669, 0
    %689 = vmatpush.msra.mxu0 0.0
    %690 = vmatpush.msra.mxu0 0.0
    %691 = vmatpush.msra.mxu0 0.0
    %692 = vmatpush.msra.mxu0 0.0
    %693 = vmatpush.msra.mxu0 0.0
    %694 = vmatpush.msra.mxu0 0.0
    %695 = vmatpush.msra.mxu0 0.0
    %696 = vmatpush.msra.mxu0 0.0
    %697 = vmatpush.msra.mxu0 0.0
    %698 = vmatpush.msra.mxu0 0.0
    %699 = vmatpush.msra.mxu0 0.0
    %700 = vmatpush.msra.mxu0 0.0
    %701 = vmatpush.msra.mxu0 %v687
    %702 = vmatpush.msra.mxu0 %v654
    %703 = vmatpush.msra.mxu0 %v639
    %704 = vmatpush.msra.mxu0 %v624
    %705 = vmatmul.f32.gmra.mxu0 %v684
    %v706 = vpop.f32.mrf.mxu0
    %v707 = vadd.f32 %v681, %v706
    %708 = vdwg.mxu0
    %v709 = vld [vmem:[%s6] sm:$0x7]
    %711 = vset.pattern.permute.xlu0 0
    %712 = vperm.xlu0 %711, %v707
    %v713 = vpop.permute.xlu0 %712
    %v716 = vsel %vm478, %v709, 0
    %718 = vmatpush.msra.mxu0 0.0
    %719 = vmatpush.msra.mxu0 0.0
    %720 = vmatpush.msra.mxu0 0.0
    %721 = vmatpush.msra.mxu0 0.0
    %722 = vmatpush.msra.mxu0 0.0
    %723 = vmatpush.msra.mxu0 0.0
    %724 = vmatpush.msra.mxu0 0.0
    %725 = vmatpush.msra.mxu0 0.0
    %726 = vmatpush.msra.mxu0 0.0
    %727 = vmatpush.msra.mxu0 0.0
    %728 = vmatpush.msra.mxu0 0.0
    %729 = vmatpush.msra.mxu0 0.0
    %730 = vmatpush.msra.mxu0 %v493
    %731 = vmatpush.msra.mxu0 %v445
    %732 = vmatpush.msra.mxu0 %v443
    %733 = vmatpush.msra.mxu0 %v441
    %734 = vmatmul.f32.gmra.mxu0 %v716
    %v735 = vpop.f32.mrf.mxu0
    %v736 = vadd.f32 %v713, %v735
    %737 = vdwg.mxu0
    %738 = vmatpush.msra.mxu0 0.0
    %739 = vmatpush.msra.mxu0 0.0
    %740 = vmatpush.msra.mxu0 0.0
    %741 = vmatpush.msra.mxu0 0.0
    %742 = vmatpush.msra.mxu0 0.0
    %743 = vmatpush.msra.mxu0 0.0
    %744 = vmatpush.msra.mxu0 0.0
    %745 = vmatpush.msra.mxu0 0.0
    %746 = vmatpush.msra.mxu0 0.0
    %747 = vmatpush.msra.mxu0 0.0
    %748 = vmatpush.msra.mxu0 0.0
    %749 = vmatpush.msra.mxu0 0.0
    %750 = vmatpush.msra.mxu0 %v496
    %751 = vmatpush.msra.mxu0 %v446
    %752 = vmatpush.msra.mxu0 %v444
    %753 = vmatpush.msra.mxu0 %v442
    %754 = vmatmul.f32.gmra.mxu0 %v716
    %v755 = vpop.f32.mrf.mxu0
    %v756 = vadd.f32 %v713, %v755
    %757 = vdwg.mxu0
    %v758 = vmax.f32 %v736, 0.0
    %v759 = vmax.f32 %v756, 0.0
    %v762 = vrot.slane %v759, 4
    %vm763 = vcmask 1043456
    %v764 = vsel %vm763, %v758, %v762
    %vm766 = vcmask 1042432
    %vm767 = vcmask 555012
    %vm768 = vmor %vm767, %vm766
    %769 = vst.msk [vmem:[#allocation2] sm:$0x77] %vm768, %v764
    %v770 = vld [vmem:[%s2] sm:$0xff]
    %v771 = vld [vmem:[%s2 + $0x8] sm:$0xff]
    %v772 = vld [vmem:[%s2 + $0x10] sm:$0xff]
    %v773 = vld [vmem:[%s2 + $0x18] sm:$0xff]
    %v774 = vld [vmem:[%s2 + $0x20] sm:$0xff]
    %v775 = vld [vmem:[%s2 + $0x28] sm:$0xff]
    %v776 = vld [vmem:[%s2 + $0x30] sm:$0xff]
    %v777 = vld [vmem:[%s2 + $0x38] sm:$0xff]
    %v778 = vld [vmem:[%s2 + $0x40] sm:$0xff]
    %v779 = vld [vmem:[%s2 + $0x48] sm:$0xff]
    %v780 = vld [vmem:[%s2 + $0x50] sm:$0xff]
    %v781 = vld [vmem:[%s2 + $0x58] sm:$0xff]
    %v782 = vld [vmem:[%s2 + $0x60] sm:$0x3f]
    %v783 = vld [vmem:[%s2 + $0x68] sm:$0x3f]
    %v784 = vld [vmem:[%s2 + $0x70] sm:$0x3f]
    %v785 = vld [vmem:[%s2 + $0x78] sm:$0x3f]
    %s786 = scalar_lea.vmem %s0, 1024
    %v787 = vld [vmem:[%s786] sm:$0xff]
    %v788 = vld [vmem:[%s786 + $0x8] sm:$0xff]
    %v789 = vld [vmem:[%s786 + $0x10] sm:$0xff]
    %v790 = vld [vmem:[%s786 + $0x18] sm:$0xff]
    %v791 = vld [vmem:[%s786 + $0x20] sm:$0xff]
    %v792 = vld [vmem:[%s786 + $0x28] sm:$0xff]
    %v793 = vld [vmem:[%s786 + $0x30] sm:$0xff]
    %v794 = vld [vmem:[%s786 + $0x38] sm:$0xff]
    %v795 = vld [vmem:[%s786 + $0x40] sm:$0xff]
    %v796 = vld [vmem:[%s786 + $0x48] sm:$0xff]
    %v797 = vld [vmem:[%s786 + $0x50] sm:$0xff]
    %v798 = vld [vmem:[%s786 + $0x58] sm:$0xff]
    %v799 = vld [vmem:[%s786 + $0x60] sm:$0xff]
    %v800 = vld [vmem:[%s786 + $0x68] sm:$0xff]
    %v801 = vld [vmem:[%s786 + $0x70] sm:$0xff]
    %v802 = vld [vmem:[%s786 + $0x78] sm:$0xff]
    %v803 = vld [vmem:[%s786 + $0x80] sm:$0xff]
    %v804 = vld [vmem:[%s786 + $0x88] sm:$0xff]
    %v805 = vld [vmem:[%s786 + $0x90] sm:$0xff]
    %v806 = vld [vmem:[%s786 + $0x98] sm:$0xff]
    %v807 = vld [vmem:[%s786 + $0xa0] sm:$0xff]
    %v808 = vld [vmem:[%s786 + $0xa8] sm:$0xff]
    %v809 = vld [vmem:[%s786 + $0xb0] sm:$0xff]
    %v810 = vld [vmem:[%s786 + $0xb8] sm:$0xff]
    %v811 = vld [vmem:[%s786 + $0xc0] sm:$0xff]
    %v812 = vld [vmem:[%s786 + $0xc8] sm:$0xff]
    %v813 = vld [vmem:[%s786 + $0xd0] sm:$0xff]
    %v814 = vld [vmem:[%s786 + $0xd8] sm:$0xff]
    %v815 = vld [vmem:[%s786 + $0xe0] sm:$0xff]
    %v816 = vld [vmem:[%s786 + $0xe8] sm:$0xff]
    %v817 = vld [vmem:[%s786 + $0xf0] sm:$0xff]
    %v818 = vld [vmem:[%s786 + $0xf8] sm:$0xff]
    %v819 = vld [vmem:[%s786 + $0x100] sm:$0xff]
    %v820 = vld [vmem:[%s786 + $0x108] sm:$0xff]
    %v821 = vld [vmem:[%s786 + $0x110] sm:$0xff]
    %v822 = vld [vmem:[%s786 + $0x118] sm:$0xff]
    %v823 = vld [vmem:[%s786 + $0x120] sm:$0xff]
    %v824 = vld [vmem:[%s786 + $0x128] sm:$0xff]
    %v825 = vld [vmem:[%s786 + $0x130] sm:$0xff]
    %v826 = vld [vmem:[%s786 + $0x138] sm:$0xff]
    %v827 = vld [vmem:[%s786 + $0x140] sm:$0xff]
    %v828 = vld [vmem:[%s786 + $0x148] sm:$0xff]
    %v829 = vld [vmem:[%s786 + $0x150] sm:$0xff]
    %v830 = vld [vmem:[%s786 + $0x158] sm:$0xff]
    %v831 = vld [vmem:[%s786 + $0x160] sm:$0xff]
    %v832 = vld [vmem:[%s786 + $0x168] sm:$0xff]
    %v833 = vld [vmem:[%s786 + $0x170] sm:$0xff]
    %v834 = vld [vmem:[%s786 + $0x178] sm:$0xff]
    %v835 = vld [vmem:[%s786 + $0x180] sm:$0xff]
    %v836 = vld [vmem:[%s786 + $0x188] sm:$0xff]
    %v837 = vld [vmem:[%s786 + $0x190] sm:$0xff]
    %v838 = vld [vmem:[%s786 + $0x198] sm:$0xff]
    %v839 = vld [vmem:[%s786 + $0x1a0] sm:$0xff]
    %v840 = vld [vmem:[%s786 + $0x1a8] sm:$0xff]
    %v841 = vld [vmem:[%s786 + $0x1b0] sm:$0xff]
    %v842 = vld [vmem:[%s786 + $0x1b8] sm:$0xff]
    %v843 = vld [vmem:[%s786 + $0x1c0] sm:$0xff]
    %v844 = vld [vmem:[%s786 + $0x1c8] sm:$0xff]
    %v845 = vld [vmem:[%s786 + $0x1d0] sm:$0xff]
    %v846 = vld [vmem:[%s786 + $0x1d8] sm:$0xff]
    %v847 = vld [vmem:[%s786 + $0x1e0] sm:$0xff]
    %v848 = vld [vmem:[%s786 + $0x1e8] sm:$0xff]
    %v849 = vld [vmem:[%s786 + $0x1f0] sm:$0xff]
    %v850 = vld [vmem:[%s786 + $0x1f8] sm:$0xff]
    %v851 = vld [vmem:[%s786 + $0x200] sm:$0xff]
    %v852 = vld [vmem:[%s786 + $0x208] sm:$0xff]
    %v853 = vld [vmem:[%s786 + $0x210] sm:$0xff]
    %v854 = vld [vmem:[%s786 + $0x218] sm:$0xff]
    %v855 = vld [vmem:[%s786 + $0x220] sm:$0xff]
    %v856 = vld [vmem:[%s786 + $0x228] sm:$0xff]
    %v857 = vld [vmem:[%s786 + $0x230] sm:$0xff]
    %v858 = vld [vmem:[%s786 + $0x238] sm:$0xff]
    %v859 = vld [vmem:[%s786 + $0x240] sm:$0xff]
    %v860 = vld [vmem:[%s786 + $0x248] sm:$0xff]
    %v861 = vld [vmem:[%s786 + $0x250] sm:$0xff]
    %v862 = vld [vmem:[%s786 + $0x258] sm:$0xff]
    %v863 = vld [vmem:[%s786 + $0x260] sm:$0xff]
    %v864 = vld [vmem:[%s786 + $0x268] sm:$0xff]
    %v865 = vld [vmem:[%s786 + $0x270] sm:$0xff]
    %v866 = vld [vmem:[%s786 + $0x278] sm:$0xff]
    %v867 = vld [vmem:[%s786 + $0x280] sm:$0xff]
    %v868 = vld [vmem:[%s786 + $0x288] sm:$0xff]
    %v869 = vld [vmem:[%s786 + $0x290] sm:$0xff]
    %v870 = vld [vmem:[%s786 + $0x298] sm:$0xff]
    %v871 = vld [vmem:[%s786 + $0x2a0] sm:$0xff]
    %v872 = vld [vmem:[%s786 + $0x2a8] sm:$0xff]
    %v873 = vld [vmem:[%s786 + $0x2b0] sm:$0xff]
    %v874 = vld [vmem:[%s786 + $0x2b8] sm:$0xff]
    %v875 = vld [vmem:[%s786 + $0x2c0] sm:$0xff]
    %v876 = vld [vmem:[%s786 + $0x2c8] sm:$0xff]
    %v877 = vld [vmem:[%s786 + $0x2d0] sm:$0xff]
    %v878 = vld [vmem:[%s786 + $0x2d8] sm:$0xff]
    %v879 = vld [vmem:[%s786 + $0x2e0] sm:$0xff]
    %v880 = vld [vmem:[%s786 + $0x2e8] sm:$0xff]
    %v881 = vld [vmem:[%s786 + $0x2f0] sm:$0xff]
    %v882 = vld [vmem:[%s786 + $0x2f8] sm:$0xff]
    %v883 = vld [vmem:[%s786 + $0x300] sm:$0xff]
    %v884 = vld [vmem:[%s786 + $0x308] sm:$0xff]
    %v885 = vld [vmem:[%s786 + $0x310] sm:$0xff]
    %v886 = vld [vmem:[%s786 + $0x318] sm:$0xff]
    %v887 = vld [vmem:[%s786 + $0x320] sm:$0xff]
    %v888 = vld [vmem:[%s786 + $0x328] sm:$0xff]
    %v889 = vld [vmem:[%s786 + $0x330] sm:$0xff]
    %v890 = vld [vmem:[%s786 + $0x338] sm:$0xff]
    %v891 = vld [vmem:[%s786 + $0x340] sm:$0xff]
    %v892 = vld [vmem:[%s786 + $0x348] sm:$0xff]
    %v893 = vld [vmem:[%s786 + $0x350] sm:$0xff]
    %v894 = vld [vmem:[%s786 + $0x358] sm:$0xff]
    %v895 = vld [vmem:[%s786 + $0x360] sm:$0xff]
    %v896 = vld [vmem:[%s786 + $0x368] sm:$0xff]
    %v897 = vld [vmem:[%s786 + $0x370] sm:$0xff]
    %v898 = vld [vmem:[%s786 + $0x378] sm:$0xff]
    %v899 = vld [vmem:[%s786 + $0x380] sm:$0xff]
    %v900 = vld [vmem:[%s786 + $0x388] sm:$0xff]
    %v901 = vld [vmem:[%s786 + $0x390] sm:$0xff]
    %v902 = vld [vmem:[%s786 + $0x398] sm:$0xff]
    %v903 = vld [vmem:[%s786 + $0x3a0] sm:$0xff]
    %v904 = vld [vmem:[%s786 + $0x3a8] sm:$0xff]
    %v905 = vld [vmem:[%s786 + $0x3b0] sm:$0xff]
    %v906 = vld [vmem:[%s786 + $0x3b8] sm:$0xff]
    %v907 = vld [vmem:[%s786 + $0x3c0] sm:$0xff]
    %v908 = vld [vmem:[%s786 + $0x3c8] sm:$0xff]
    %v909 = vld [vmem:[%s786 + $0x3d0] sm:$0xff]
    %v910 = vld [vmem:[%s786 + $0x3d8] sm:$0xff]
    %v911 = vld [vmem:[%s786 + $0x3e0] sm:$0xff]
    %v912 = vld [vmem:[%s786 + $0x3e8] sm:$0xff]
    %v913 = vld [vmem:[%s786 + $0x3f0] sm:$0xff]
    %v914 = vld [vmem:[%s786 + $0x3f8] sm:$0xff]
    %v915 = vld [vmem:[%s3] sm:$0xff]
    %v916 = vld [vmem:[%s3 + $0x8] sm:$0xff]
    %v917 = vld [vmem:[%s3 + $0x10] sm:$0xff]
    %v918 = vld [vmem:[%s3 + $0x18] sm:$0x3f]
    %920 = vset.pattern.permute.xlu0 0
    %921 = vperm.xlu0 %920, %v915
    %v922 = vpop.permute.xlu0 %921
    %925 = vset.pattern.permute.xlu0 0
    %926 = vperm.xlu0 %925, %v916
    %v927 = vpop.permute.xlu0 %926
    %930 = vset.pattern.permute.xlu0 0
    %931 = vperm.xlu0 %930, %v917
    %v932 = vpop.permute.xlu0 %931
    %935 = vset.pattern.permute.xlu0 0
    %936 = vperm.xlu0 %935, %v918
    %v937 = vpop.permute.xlu0 %936
    %939 = vmatpush.msra.mxu0 %v817
    %940 = vmatpush.msra.mxu0 %v815
    %941 = vmatpush.msra.mxu0 %v813
    %942 = vmatpush.msra.mxu0 %v811
    %943 = vmatpush.msra.mxu0 %v809
    %944 = vmatpush.msra.mxu0 %v807
    %945 = vmatpush.msra.mxu0 %v805
    %946 = vmatpush.msra.mxu0 %v803
    %947 = vmatpush.msra.mxu0 %v801
    %948 = vmatpush.msra.mxu0 %v799
    %949 = vmatpush.msra.mxu0 %v797
    %950 = vmatpush.msra.mxu0 %v795
    %951 = vmatpush.msra.mxu0 %v793
    %952 = vmatpush.msra.mxu0 %v791
    %953 = vmatpush.msra.mxu0 %v789
    %954 = vmatpush.msra.mxu0 %v787
    %955 = vmatmul.f32.gmra.mxu0 %v770
    %v956 = vpop.f32.mrf.mxu0
    %v957 = vadd.f32 %v922, %v956
    %958 = vmatmul.f32.gmra.mxu0 %v774
    %v959 = vpop.f32.mrf.mxu0
    %v960 = vadd.f32 %v927, %v959
    %961 = vmatmul.f32.gmra.mxu0 %v778
    %v962 = vpop.f32.mrf.mxu0
    %v963 = vadd.f32 %v932, %v962
    %964 = vmatmul.f32.gmra.mxu0 %v782
    %v965 = vpop.f32.mrf.mxu0
    %v966 = vadd.f32 %v937, %v965
    %967 = vdwg.mxu0
    %968 = vmatpush.msra.mxu0 %v849
    %969 = vmatpush.msra.mxu0 %v847
    %970 = vmatpush.msra.mxu0 %v845
    %971 = vmatpush.msra.mxu0 %v843
    %972 = vmatpush.msra.mxu0 %v841
    %973 = vmatpush.msra.mxu0 %v839
    %974 = vmatpush.msra.mxu0 %v837
    %975 = vmatpush.msra.mxu0 %v835
    %976 = vmatpush.msra.mxu0 %v833
    %977 = vmatpush.msra.mxu0 %v831
    %978 = vmatpush.msra.mxu0 %v829
    %979 = vmatpush.msra.mxu0 %v827
    %980 = vmatpush.msra.mxu0 %v825
    %981 = vmatpush.msra.mxu0 %v823
    %982 = vmatpush.msra.mxu0 %v821
    %983 = vmatpush.msra.mxu0 %v819
    %984 = vmatmul.f32.gmra.mxu0 %v771
    %v985 = vpop.f32.mrf.mxu0
    %v986 = vadd.f32 %v957, %v985
    %987 = vmatmul.f32.gmra.mxu0 %v775
    %v988 = vpop.f32.mrf.mxu0
    %v989 = vadd.f32 %v960, %v988
    %990 = vmatmul.f32.gmra.mxu0 %v779
    %v991 = vpop.f32.mrf.mxu0
    %v992 = vadd.f32 %v963, %v991
    %993 = vmatmul.f32.gmra.mxu0 %v783
    %v994 = vpop.f32.mrf.mxu0
    %v995 = vadd.f32 %v966, %v994
    %996 = vdwg.mxu0
    %997 = vmatpush.msra.mxu0 %v881
    %998 = vmatpush.msra.mxu0 %v879
    %999 = vmatpush.msra.mxu0 %v877
    %1000 = vmatpush.msra.mxu0 %v875
    %1001 = vmatpush.msra.mxu0 %v873
    %1002 = vmatpush.msra.mxu0 %v871
    %1003 = vmatpush.msra.mxu0 %v869
    %1004 = vmatpush.msra.mxu0 %v867
    %1005 = vmatpush.msra.mxu0 %v865
    %1006 = vmatpush.msra.mxu0 %v863
    %1007 = vmatpush.msra.mxu0 %v861
    %1008 = vmatpush.msra.mxu0 %v859
    %1009 = vmatpush.msra.mxu0 %v857
    %1010 = vmatpush.msra.mxu0 %v855
    %1011 = vmatpush.msra.mxu0 %v853
    %1012 = vmatpush.msra.mxu0 %v851
    %1013 = vmatmul.f32.gmra.mxu0 %v772
    %v1014 = vpop.f32.mrf.mxu0
    %v1015 = vadd.f32 %v986, %v1014
    %1016 = vmatmul.f32.gmra.mxu0 %v776
    %v1017 = vpop.f32.mrf.mxu0
    %v1018 = vadd.f32 %v989, %v1017
    %1019 = vmatmul.f32.gmra.mxu0 %v780
    %v1020 = vpop.f32.mrf.mxu0
    %v1021 = vadd.f32 %v992, %v1020
    %1022 = vmatmul.f32.gmra.mxu0 %v784
    %v1023 = vpop.f32.mrf.mxu0
    %v1024 = vadd.f32 %v995, %v1023
    %1025 = vdwg.mxu0
    %1026 = vmatpush.msra.mxu0 %v913
    %1027 = vmatpush.msra.mxu0 %v911
    %1028 = vmatpush.msra.mxu0 %v909
    %1029 = vmatpush.msra.mxu0 %v907
    %1030 = vmatpush.msra.mxu0 %v905
    %1031 = vmatpush.msra.mxu0 %v903
    %1032 = vmatpush.msra.mxu0 %v901
    %1033 = vmatpush.msra.mxu0 %v899
    %1034 = vmatpush.msra.mxu0 %v897
    %1035 = vmatpush.msra.mxu0 %v895
    %1036 = vmatpush.msra.mxu0 %v893
    %1037 = vmatpush.msra.mxu0 %v891
    %1038 = vmatpush.msra.mxu0 %v889
    %1039 = vmatpush.msra.mxu0 %v887
    %1040 = vmatpush.msra.mxu0 %v885
    %1041 = vmatpush.msra.mxu0 %v883
    %1042 = vmatmul.f32.gmra.mxu0 %v773
    %v1043 = vpop.f32.mrf.mxu0
    %v1044 = vadd.f32 %v1015, %v1043
    %1045 = vmatmul.f32.gmra.mxu0 %v777
    %v1046 = vpop.f32.mrf.mxu0
    %v1047 = vadd.f32 %v1018, %v1046
    %1048 = vmatmul.f32.gmra.mxu0 %v781
    %v1049 = vpop.f32.mrf.mxu0
    %v1050 = vadd.f32 %v1021, %v1049
    %1051 = vmatmul.f32.gmra.mxu0 %v785
    %v1052 = vpop.f32.mrf.mxu0
    %v1053 = vadd.f32 %v1024, %v1052
    %1054 = vdwg.mxu0
    %1055 = vmatpush.msra.mxu0 %v818
    %1056 = vmatpush.msra.mxu0 %v816
    %1057 = vmatpush.msra.mxu0 %v814
    %1058 = vmatpush.msra.mxu0 %v812
    %1059 = vmatpush.msra.mxu0 %v810
    %1060 = vmatpush.msra.mxu0 %v808
    %1061 = vmatpush.msra.mxu0 %v806
    %1062 = vmatpush.msra.mxu0 %v804
    %1063 = vmatpush.msra.mxu0 %v802
    %1064 = vmatpush.msra.mxu0 %v800
    %1065 = vmatpush.msra.mxu0 %v798
    %1066 = vmatpush.msra.mxu0 %v796
    %1067 = vmatpush.msra.mxu0 %v794
    %1068 = vmatpush.msra.mxu0 %v792
    %1069 = vmatpush.msra.mxu0 %v790
    %1070 = vmatpush.msra.mxu0 %v788
    %1071 = vmatmul.f32.gmra.mxu0 %v770
    %v1072 = vpop.f32.mrf.mxu0
    %v1073 = vadd.f32 %v922, %v1072
    %1074 = vmatmul.f32.gmra.mxu0 %v774
    %v1075 = vpop.f32.mrf.mxu0
    %v1076 = vadd.f32 %v927, %v1075
    %1077 = vmatmul.f32.gmra.mxu0 %v778
    %v1078 = vpop.f32.mrf.mxu0
    %v1079 = vadd.f32 %v932, %v1078
    %1080 = vmatmul.f32.gmra.mxu0 %v782
    %v1081 = vpop.f32.mrf.mxu0
    %v1082 = vadd.f32 %v937, %v1081
    %1083 = vdwg.mxu0
    %1084 = vmatpush.msra.mxu0 %v850
    %1085 = vmatpush.msra.mxu0 %v848
    %1086 = vmatpush.msra.mxu0 %v846
    %1087 = vmatpush.msra.mxu0 %v844
    %1088 = vmatpush.msra.mxu0 %v842
    %1089 = vmatpush.msra.mxu0 %v840
    %1090 = vmatpush.msra.mxu0 %v838
    %1091 = vmatpush.msra.mxu0 %v836
    %1092 = vmatpush.msra.mxu0 %v834
    %1093 = vmatpush.msra.mxu0 %v832
    %1094 = vmatpush.msra.mxu0 %v830
    %1095 = vmatpush.msra.mxu0 %v828
    %1096 = vmatpush.msra.mxu0 %v826
    %1097 = vmatpush.msra.mxu0 %v824
    %1098 = vmatpush.msra.mxu0 %v822
    %1099 = vmatpush.msra.mxu0 %v820
    %1100 = vmatmul.f32.gmra.mxu0 %v771
    %v1101 = vpop.f32.mrf.mxu0
    %v1102 = vadd.f32 %v1073, %v1101
    %1103 = vmatmul.f32.gmra.mxu0 %v775
    %v1104 = vpop.f32.mrf.mxu0
    %v1105 = vadd.f32 %v1076, %v1104
    %1106 = vmatmul.f32.gmra.mxu0 %v779
    %v1107 = vpop.f32.mrf.mxu0
    %v1108 = vadd.f32 %v1079, %v1107
    %1109 = vmatmul.f32.gmra.mxu0 %v783
    %v1110 = vpop.f32.mrf.mxu0
    %v1111 = vadd.f32 %v1082, %v1110
    %1112 = vdwg.mxu0
    %1113 = vmatpush.msra.mxu0 %v882
    %1114 = vmatpush.msra.mxu0 %v880
    %1115 = vmatpush.msra.mxu0 %v878
    %1116 = vmatpush.msra.mxu0 %v876
    %1117 = vmatpush.msra.mxu0 %v874
    %1118 = vmatpush.msra.mxu0 %v872
    %1119 = vmatpush.msra.mxu0 %v870
    %1120 = vmatpush.msra.mxu0 %v868
    %1121 = vmatpush.msra.mxu0 %v866
    %1122 = vmatpush.msra.mxu0 %v864
    %1123 = vmatpush.msra.mxu0 %v862
    %1124 = vmatpush.msra.mxu0 %v860
    %1125 = vmatpush.msra.mxu0 %v858
    %1126 = vmatpush.msra.mxu0 %v856
    %1127 = vmatpush.msra.mxu0 %v854
    %1128 = vmatpush.msra.mxu0 %v852
    %1129 = vmatmul.f32.gmra.mxu0 %v772
    %v1130 = vpop.f32.mrf.mxu0
    %v1131 = vadd.f32 %v1102, %v1130
    %1132 = vmatmul.f32.gmra.mxu0 %v776
    %v1133 = vpop.f32.mrf.mxu0
    %v1134 = vadd.f32 %v1105, %v1133
    %1135 = vmatmul.f32.gmra.mxu0 %v780
    %v1136 = vpop.f32.mrf.mxu0
    %v1137 = vadd.f32 %v1108, %v1136
    %1138 = vmatmul.f32.gmra.mxu0 %v784
    %v1139 = vpop.f32.mrf.mxu0
    %v1140 = vadd.f32 %v1111, %v1139
    %1141 = vdwg.mxu0
    %1142 = vmatpush.msra.mxu0 %v914
    %1143 = vmatpush.msra.mxu0 %v912
    %1144 = vmatpush.msra.mxu0 %v910
    %1145 = vmatpush.msra.mxu0 %v908
    %1146 = vmatpush.msra.mxu0 %v906
    %1147 = vmatpush.msra.mxu0 %v904
    %1148 = vmatpush.msra.mxu0 %v902
    %1149 = vmatpush.msra.mxu0 %v900
    %1150 = vmatpush.msra.mxu0 %v898
    %1151 = vmatpush.msra.mxu0 %v896
    %1152 = vmatpush.msra.mxu0 %v894
    %1153 = vmatpush.msra.mxu0 %v892
    %1154 = vmatpush.msra.mxu0 %v890
    %1155 = vmatpush.msra.mxu0 %v888
    %1156 = vmatpush.msra.mxu0 %v886
    %1157 = vmatpush.msra.mxu0 %v884
    %1158 = vmatmul.f32.gmra.mxu0 %v773
    %v1159 = vpop.f32.mrf.mxu0
    %v1160 = vadd.f32 %v1131, %v1159
    %1161 = vmatmul.f32.gmra.mxu0 %v777
    %v1162 = vpop.f32.mrf.mxu0
    %v1163 = vadd.f32 %v1134, %v1162
    %1164 = vmatmul.f32.gmra.mxu0 %v781
    %v1165 = vpop.f32.mrf.mxu0
    %v1166 = vadd.f32 %v1137, %v1165
    %1167 = vmatmul.f32.gmra.mxu0 %v785
    %v1168 = vpop.f32.mrf.mxu0
    %v1169 = vadd.f32 %v1140, %v1168
    %1170 = vdwg.mxu0
    %v1171 = vmax.f32 %v1044, 0.0
    %v1172 = vmax.f32 %v1160, 0.0
    %v1173 = vmax.f32 %v1047, 0.0
    %v1174 = vmax.f32 %v1163, 0.0
    %v1175 = vmax.f32 %v1050, 0.0
    %v1176 = vmax.f32 %v1166, 0.0
    %v1177 = vmax.f32 %v1053, 0.0
    %v1178 = vmax.f32 %v1169, 0.0
    %s1179 = scalar_lea.vmem %s1, 40
    %v1180 = vld [vmem:[%s1179] sm:$0xff]
    %v1181 = vld [vmem:[%s1179 + $0x8] sm:$0xff]
    %v1182 = vld [vmem:[%s1179 + $0x10] sm:$0xff]
    %v1183 = vld [vmem:[%s1179 + $0x18] sm:$0xff]
    %v1184 = vld [vmem:[%s1179 + $0x20] sm:$0x1]
    %v1185 = vld [vmem:[%s4] sm:$0xff]
    %v1186 = vld [vmem:[%s4 + $0x8] sm:$0xff]
    %v1187 = vld [vmem:[%s4 + $0x10] sm:$0xff]
    %v1188 = vld [vmem:[%s4 + $0x18] sm:$0x3f]
    %1190 = vset.pattern.permute.xlu0 0
    %1191 = vperm.xlu0 %1190, %v1180
    %v1192 = vpop.permute.xlu0 %1191
    %1195 = vset.pattern.permute.xlu0 0
    %1196 = vperm.xlu0 %1195, %v1181
    %v1197 = vpop.permute.xlu0 %1196
    %1200 = vset.pattern.permute.xlu0 0
    %1201 = vperm.xlu0 %1200, %v1182
    %v1202 = vpop.permute.xlu0 %1201
    %1205 = vset.pattern.permute.xlu0 0
    %1206 = vperm.xlu0 %1205, %v1183
    %v1207 = vpop.permute.xlu0 %1206
    %v1210 = vsel %vm478, %v1185, 0
    %v1213 = vsel %vm478, %v1186, 0
    %v1216 = vsel %vm478, %v1187, 0
    %v1219 = vsel %vm478, %v1188, 0
    %v1222 = vsel %vm491, %v1177, 0
    %v1225 = vsel %vm491, %v1178, 0
    %1227 = vmatpush.msra.mxu0 0.0
    %1228 = vmatpush.msra.mxu0 0.0
    %1229 = vmatpush.msra.mxu0 0.0
    %1230 = vmatpush.msra.mxu0 0.0
    %1231 = vmatpush.msra.mxu0 0.0
    %1232 = vmatpush.msra.mxu0 0.0
    %1233 = vmatpush.msra.mxu0 0.0
    %1234 = vmatpush.msra.mxu0 0.0
    %1235 = vmatpush.msra.mxu0 0.0
    %1236 = vmatpush.msra.mxu0 0.0
    %1237 = vmatpush.msra.mxu0 0.0
    %1238 = vmatpush.msra.mxu0 0.0
    %1239 = vmatpush.msra.mxu0 %v1222
    %1240 = vmatpush.msra.mxu0 %v1175
    %1241 = vmatpush.msra.mxu0 %v1173
    %1242 = vmatpush.msra.mxu0 %v1171
    %1243 = vmatmul.f32.gmra.mxu0 %v1210
    %v1244 = vpop.f32.mrf.mxu0
    %v1245 = vadd.f32 %v1192, %v1244
    %1246 = vmatmul.f32.gmra.mxu0 %v1213
    %v1247 = vpop.f32.mrf.mxu0
    %v1248 = vadd.f32 %v1197, %v1247
    %1249 = vmatmul.f32.gmra.mxu0 %v1216
    %v1250 = vpop.f32.mrf.mxu0
    %v1251 = vadd.f32 %v1202, %v1250
    %1252 = vmatmul.f32.gmra.mxu0 %v1219
    %v1253 = vpop.f32.mrf.mxu0
    %v1254 = vadd.f32 %v1207, %v1253
    %1255 = vdwg.mxu0
    %1256 = vmatpush.msra.mxu0 0.0
    %1257 = vmatpush.msra.mxu0 0.0
    %1258 = vmatpush.msra.mxu0 0.0
    %1259 = vmatpush.msra.mxu0 0.0
    %1260 = vmatpush.msra.mxu0 0.0
    %1261 = vmatpush.msra.mxu0 0.0
    %1262 = vmatpush.msra.mxu0 0.0
    %1263 = vmatpush.msra.mxu0 0.0
    %1264 = vmatpush.msra.mxu0 0.0
    %1265 = vmatpush.msra.mxu0 0.0
    %1266 = vmatpush.msra.mxu0 0.0
    %1267 = vmatpush.msra.mxu0 0.0
    %1268 = vmatpush.msra.mxu0 %v1225
    %1269 = vmatpush.msra.mxu0 %v1176
    %1270 = vmatpush.msra.mxu0 %v1174
    %1271 = vmatpush.msra.mxu0 %v1172
    %1272 = vmatmul.f32.gmra.mxu0 %v1210
    %v1273 = vpop.f32.mrf.mxu0
    %v1274 = vadd.f32 %v1192, %v1273
    %1275 = vmatmul.f32.gmra.mxu0 %v1213
    %v1276 = vpop.f32.mrf.mxu0
    %v1277 = vadd.f32 %v1197, %v1276
    %1278 = vmatmul.f32.gmra.mxu0 %v1216
    %v1279 = vpop.f32.mrf.mxu0
    %v1280 = vadd.f32 %v1202, %v1279
    %1281 = vmatmul.f32.gmra.mxu0 %v1219
    %v1282 = vpop.f32.mrf.mxu0
    %v1283 = vadd.f32 %v1207, %v1282
    %1284 = vdwg.mxu0
    %v1285 = vmax.f32 %v1245, 0.0
    %v1286 = vmax.f32 %v1274, 0.0
    %v1287 = vmax.f32 %v1248, 0.0
    %v1288 = vmax.f32 %v1277, 0.0
    %v1289 = vmax.f32 %v1251, 0.0
    %v1290 = vmax.f32 %v1280, 0.0
    %v1291 = vmax.f32 %v1254, 0.0
    %v1292 = vmax.f32 %v1283, 0.0
    %v1293 = vsel %vm564, %v1286, 0.0
    %v1294 = vadd.f32 %v1285, %v1293
    %1295 = vadd.xlane.f32.xlu0 %v1294
    %v1296 = vpop.xlane.xlu0 %1295
    %v1297 = vsel %vm564, %v1288, 0.0
    %v1298 = vadd.f32 %v1287, %v1297
    %1299 = vadd.xlane.f32.xlu0 %v1298
    %v1300 = vpop.xlane.xlu0 %1299
    %v1301 = vsel %vm564, %v1290, 0.0
    %v1302 = vadd.f32 %v1289, %v1301
    %1303 = vadd.xlane.f32.xlu0 %v1302
    %v1304 = vpop.xlane.xlu0 %1303
    %v1305 = vsel %vm491, %v1291, 0.0
    %v1306 = vsel %vm578, %v1292, 0.0
    %v1307 = vadd.f32 %v1305, %v1306
    %1308 = vadd.xlane.f32.xlu0 %v1307
    %v1309 = vpop.xlane.xlu0 %1308
    %v1310 = vmul.f32 %v1296, %v589
    %v1311 = vmul.f32 %v1300, %v589
    %v1312 = vmul.f32 %v1304, %v589
    %v1313 = vmul.f32 %v1309, %v589
    %v1314 = vxor.u32 %v1310, 2147483648
    %v1315 = vxor.u32 %v1311, 2147483648
    %v1316 = vxor.u32 %v1312, 2147483648
    %v1317 = vxor.u32 %v1313, 2147483648
    %v1318 = vmul.f32 %v1314, 1.442695
    %v1319 = vpow.pop %v1318
    %v1320 = vmul.f32 %v1315, 1.442695
    %v1321 = vpow.pop %v1320
    %v1322 = vmul.f32 %v1316, 1.442695
    %v1323 = vpow.pop %v1322
    %v1324 = vmul.f32 %v1317, 1.442695
    %v1325 = vpow.pop %v1324
    %v1326 = vadd.f32 %v1319, 1.0
    %v1327 = vadd.f32 %v1321, 1.0
    %v1328 = vadd.f32 %v1323, 1.0
    %v1329 = vadd.f32 %v1325, 1.0
    %v1330 = vrcp.pop %v1326
    %v1331 = vmul.f32 %v1326, %v1330
    %v1332 = vsub.f32 1.0, %v1331
    %v1333 = vmul.f32 %v1330, %v1332
    %v1334 = vadd.f32 %v1330, %v1333
    %vm1335 = vweird.f32 %v1326
    %vm1336 = vweird.f32 %v1330
    %vm1337 = vmor %vm1335, %vm1336
    %v1338 = vsel %vm1337, %v1330, %v1334
    %v1339 = vand.u32 2147483647, %v1326
    %vm1340 = vcmp.eq.f32.partialorder %v1339, 8.507059e+37
    %v1341 = vand.u32 %v1326, 2147483648
    %v1342 = vor.u32 1.1754944e-38, %v1341
    %v1343 = vsel %vm1340, %v1342, %v1338
    %v1344 = vmul.f32 1.0, %v1343
    %v1345 = vrcp.pop %v1327
    %v1346 = vmul.f32 %v1327, %v1345
    %v1347 = vsub.f32 1.0, %v1346
    %v1348 = vmul.f32 %v1345, %v1347
    %v1349 = vadd.f32 %v1345, %v1348
    %vm1350 = vweird.f32 %v1327
    %vm1351 = vweird.f32 %v1345
    %vm1352 = vmor %vm1350, %vm1351
    %v1353 = vsel %vm1352, %v1345, %v1349
    %v1354 = vand.u32 2147483647, %v1327
    %vm1355 = vcmp.eq.f32.partialorder %v1354, 8.507059e+37
    %v1356 = vand.u32 %v1327, 2147483648
    %v1357 = vor.u32 1.1754944e-38, %v1356
    %v1358 = vsel %vm1355, %v1357, %v1353
    %v1359 = vmul.f32 1.0, %v1358
    %v1360 = vrcp.pop %v1328
    %v1361 = vmul.f32 %v1328, %v1360
    %v1362 = vsub.f32 1.0, %v1361
    %v1363 = vmul.f32 %v1360, %v1362
    %v1364 = vadd.f32 %v1360, %v1363
    %vm1365 = vweird.f32 %v1328
    %vm1366 = vweird.f32 %v1360
    %vm1367 = vmor %vm1365, %vm1366
    %v1368 = vsel %vm1367, %v1360, %v1364
    %v1369 = vand.u32 2147483647, %v1328
    %vm1370 = vcmp.eq.f32.partialorder %v1369, 8.507059e+37
    %v1371 = vand.u32 %v1328, 2147483648
    %v1372 = vor.u32 1.1754944e-38, %v1371
    %v1373 = vsel %vm1370, %v1372, %v1368
    %v1374 = vmul.f32 1.0, %v1373
    %v1375 = vrcp.pop %v1329
    %v1376 = vmul.f32 %v1329, %v1375
    %v1377 = vsub.f32 1.0, %v1376
    %v1378 = vmul.f32 %v1375, %v1377
    %v1379 = vadd.f32 %v1375, %v1378
    %vm1380 = vweird.f32 %v1329
    %vm1381 = vweird.f32 %v1375
    %vm1382 = vmor %vm1380, %vm1381
    %v1383 = vsel %vm1382, %v1375, %v1379
    %v1384 = vand.u32 2147483647, %v1329
    %vm1385 = vcmp.eq.f32.partialorder %v1384, 8.507059e+37
    %v1386 = vand.u32 %v1329, 2147483648
    %v1387 = vor.u32 1.1754944e-38, %v1386
    %v1388 = vsel %vm1385, %v1387, %v1383
    %v1389 = vmul.f32 1.0, %v1388
    %s1390 = scalar_lea.vmem %s11, 32
    %1391 = vst.msk [vmem:[%s1390] sm:$0xff] %vm670, %v1344
    %1392 = vst.msk [vmem:[%s1390 + $0x8] sm:$0xff] %vm670, %v1359
    %1393 = vst.msk [vmem:[%s1390 + $0x10] sm:$0xff] %vm670, %v1374
    %1394 = vst.msk [vmem:[%s1390 + $0x18] sm:$0x3f] %vm674, %v1389
    %v1395 = vld [vmem:[%s5] sm:$0x7]
    %v1397 = vrot.slane %v1183, 6
    %v1398 = vrot.slane %v1184, 6
    %v1399 = vsel %vm678, %v1397, %v1398
    %v1402 = vsel %vm478, %v1395, 0
    %v1405 = vsel %vm491, %v1389, 0
    %1407 = vmatpush.msra.mxu0 0.0
    %1408 = vmatpush.msra.mxu0 0.0
    %1409 = vmatpush.msra.mxu0 0.0
    %1410 = vmatpush.msra.mxu0 0.0
    %1411 = vmatpush.msra.mxu0 0.0
    %1412 = vmatpush.msra.mxu0 0.0
    %1413 = vmatpush.msra.mxu0 0.0
    %1414 = vmatpush.msra.mxu0 0.0
    %1415 = vmatpush.msra.mxu0 0.0
    %1416 = vmatpush.msra.mxu0 0.0
    %1417 = vmatpush.msra.mxu0 0.0
    %1418 = vmatpush.msra.mxu0 0.0
    %1419 = vmatpush.msra.mxu0 %v1405
    %1420 = vmatpush.msra.mxu0 %v1374
    %1421 = vmatpush.msra.mxu0 %v1359
    %1422 = vmatpush.msra.mxu0 %v1344
    %1423 = vmatmul.f32.gmra.mxu0 %v1402
    %v1424 = vpop.f32.mrf.mxu0
    %v1425 = vadd.f32 %v1399, %v1424
    %1426 = vdwg.mxu0
    %v1427 = vld [vmem:[%s6] sm:$0x7]
    %1429 = vset.pattern.permute.xlu0 0
    %1430 = vperm.xlu0 %1429, %v1425
    %v1431 = vpop.permute.xlu0 %1430
    %v1434 = vsel %vm478, %v1427, 0
    %1436 = vmatpush.msra.mxu0 0.0
    %1437 = vmatpush.msra.mxu0 0.0
    %1438 = vmatpush.msra.mxu0 0.0
    %1439 = vmatpush.msra.mxu0 0.0
    %1440 = vmatpush.msra.mxu0 0.0
    %1441 = vmatpush.msra.mxu0 0.0
    %1442 = vmatpush.msra.mxu0 0.0
    %1443 = vmatpush.msra.mxu0 0.0
    %1444 = vmatpush.msra.mxu0 0.0
    %1445 = vmatpush.msra.mxu0 0.0
    %1446 = vmatpush.msra.mxu0 0.0
    %1447 = vmatpush.msra.mxu0 0.0
    %1448 = vmatpush.msra.mxu0 %v1222
    %1449 = vmatpush.msra.mxu0 %v1175
    %1450 = vmatpush.msra.mxu0 %v1173
    %1451 = vmatpush.msra.mxu0 %v1171
    %1452 = vmatmul.f32.gmra.mxu0 %v1434
    %v1453 = vpop.f32.mrf.mxu0
    %v1454 = vadd.f32 %v1431, %v1453
    %1455 = vdwg.mxu0
    %1456 = vmatpush.msra.mxu0 0.0
    %1457 = vmatpush.msra.mxu0 0.0
    %1458 = vmatpush.msra.mxu0 0.0
    %1459 = vmatpush.msra.mxu0 0.0
    %1460 = vmatpush.msra.mxu0 0.0
    %1461 = vmatpush.msra.mxu0 0.0
    %1462 = vmatpush.msra.mxu0 0.0
    %1463 = vmatpush.msra.mxu0 0.0
    %1464 = vmatpush.msra.mxu0 0.0
    %1465 = vmatpush.msra.mxu0 0.0
    %1466 = vmatpush.msra.mxu0 0.0
    %1467 = vmatpush.msra.mxu0 0.0
    %1468 = vmatpush.msra.mxu0 %v1225
    %1469 = vmatpush.msra.mxu0 %v1176
    %1470 = vmatpush.msra.mxu0 %v1174
    %1471 = vmatpush.msra.mxu0 %v1172
    %1472 = vmatmul.f32.gmra.mxu0 %v1434
    %v1473 = vpop.f32.mrf.mxu0
    %v1474 = vadd.f32 %v1431, %v1473
    %1475 = vdwg.mxu0
    %v1476 = vmax.f32 %v1454, 0.0
    %v1477 = vmax.f32 %v1474, 0.0
    %v1480 = vrot.slane %v1477, 4
    %v1481 = vsel %vm763, %v1476, %v1480
    %s1483 = scalar_lea.vmem [#allocation2], 8
    %1484 = vst.msk [vmem:[%s1483] sm:$0x77] %vm768, %v1481
    %v1485 = vld [vmem:[%s8] sm:$0x1]
    %v1486 = vld [vmem:[#allocation2] ss:$4 sm:$0x3]
    %s1487 = scalar_lea.vmem [#allocation2], 8
    %v1488 = vld [vmem:[%s1487] ss:$4 sm:$0x3]
    %v1489 = vld [vmem:[%s7] sm:$0xff]
    %v1490 = vld [vmem:[%s7 + $0x8] sm:$0xff]
    %v1491 = vld [vmem:[%s7 + $0x10] sm:$0xff]
    %v1492 = vld [vmem:[%s7 + $0x18] sm:$0xff]
    %v1493 = vld [vmem:[%s7 + $0x20] sm:$0xff]
    %v1494 = vld [vmem:[%s7 + $0x28] sm:$0xff]
    %v1495 = vld [vmem:[%s7 + $0x30] sm:$0xff]
    %v1496 = vld [vmem:[%s7 + $0x38] sm:$0xff]
    %v1497 = vld [vmem:[%s7 + $0x40] sm:$0xff]
    %v1498 = vld [vmem:[%s7 + $0x48] sm:$0xff]
    %v1499 = vld [vmem:[%s7 + $0x50] sm:$0xff]
    %v1500 = vld [vmem:[%s7 + $0x58] sm:$0xff]
    %v1501 = vld [vmem:[%s7 + $0x60] sm:$0xff]
    %v1502 = vld [vmem:[%s7 + $0x68] sm:$0xff]
    %v1503 = vld [vmem:[%s7 + $0x70] sm:$0xff]
    %v1504 = vld [vmem:[%s7 + $0x78] sm:$0xff]
    %v1505 = vld [vmem:[%s7 + $0x80] sm:$0xff]
    %v1506 = vld [vmem:[%s7 + $0x88] sm:$0xff]
    %v1507 = vld [vmem:[%s7 + $0x90] sm:$0xff]
    %v1508 = vld [vmem:[%s7 + $0x98] sm:$0xff]
    %v1509 = vld [vmem:[%s7 + $0xa0] sm:$0xff]
    %v1510 = vld [vmem:[%s7 + $0xa8] sm:$0xff]
    %v1511 = vld [vmem:[%s7 + $0xb0] sm:$0xff]
    %v1512 = vld [vmem:[%s7 + $0xb8] sm:$0xff]
    %v1513 = vld [vmem:[%s7 + $0xc0] sm:$0xf]
    %1516 = vst [vmem:[#allocation1] ss:$9 sm:$0xff] %v1486
    %s1517 = scalar_lea.vmem [#allocation1], 1
    %1518 = vst [vmem:[%s1517] ss:$9 sm:$0xff] %v1488
    %v1519 = vld [vmem:[#allocation1] sm:$0xff]
    %v1520 = vld [vmem:[#allocation1 + $0x9] sm:$0xff]
    %v1522 = vsel %vm564, %v1520, 0
    %v1525 = vsel %vm763, %v1513, 0
    %1527 = vmatpush.msra.mxu0 %v1504
    %1528 = vmatpush.msra.mxu0 %v1503
    %1529 = vmatpush.msra.mxu0 %v1502
    %1530 = vmatpush.msra.mxu0 %v1501
    %1531 = vmatpush.msra.mxu0 %v1500
    %1532 = vmatpush.msra.mxu0 %v1499
    %1533 = vmatpush.msra.mxu0 %v1498
    %1534 = vmatpush.msra.mxu0 %v1497
    %1535 = vmatpush.msra.mxu0 %v1496
    %1536 = vmatpush.msra.mxu0 %v1495
    %1537 = vmatpush.msra.mxu0 %v1494
    %1538 = vmatpush.msra.mxu0 %v1493
    %1539 = vmatpush.msra.mxu0 %v1492
    %1540 = vmatpush.msra.mxu0 %v1491
    %1541 = vmatpush.msra.mxu0 %v1490
    %1542 = vmatpush.msra.mxu0 %v1489
    %1543 = vmatmul.f32.gmra.mxu0 %v1519
    %v1544 = vpop.f32.mrf.mxu0
    %v1545 = vadd.f32 0.0, %v1544
    %1546 = vdwg.mxu0
    %1547 = vmatpush.msra.mxu0 0.0
    %1548 = vmatpush.msra.mxu0 0.0
    %1549 = vmatpush.msra.mxu0 0.0
    %1550 = vmatpush.msra.mxu0 0.0
    %1551 = vmatpush.msra.mxu0 0.0
    %1552 = vmatpush.msra.mxu0 0.0
    %1553 = vmatpush.msra.mxu0 0.0
    %1554 = vmatpush.msra.mxu0 %v1525
    %1555 = vmatpush.msra.mxu0 %v1512
    %1556 = vmatpush.msra.mxu0 %v1511
    %1557 = vmatpush.msra.mxu0 %v1510
    %1558 = vmatpush.msra.mxu0 %v1509
    %1559 = vmatpush.msra.mxu0 %v1508
    %1560 = vmatpush.msra.mxu0 %v1507
    %1561 = vmatpush.msra.mxu0 %v1506
    %1562 = vmatpush.msra.mxu0 %v1505
    %1563 = vmatmul.f32.gmra.mxu0 %v1522
    %v1564 = vpop.f32.mrf.mxu0
    %v1565 = vadd.f32 %v1545, %v1564
    %1566 = vdwg.mxu0
    %v1568 = vperm.slane %v1485, 0
    %v1570 = vadd.f32 %v1568, %v1565
    %s1571 = scalar_lea.vmem [#allocation2], 1
    %v1572 = vld [vmem:[%s1571] ss:$4 sm:$0x3]
    %s1573 = scalar_lea.vmem [#allocation2], 9
    %v1574 = vld [vmem:[%s1573] ss:$4 sm:$0x3]
    %s1575 = scalar_lea.vmem %s7, 200
    %v1576 = vld [vmem:[%s1575] sm:$0xff]
    %v1577 = vld [vmem:[%s1575 + $0x8] sm:$0xff]
    %v1578 = vld [vmem:[%s1575 + $0x10] sm:$0xff]
    %v1579 = vld [vmem:[%s1575 + $0x18] sm:$0xff]
    %v1580 = vld [vmem:[%s1575 + $0x20] sm:$0xff]
    %v1581 = vld [vmem:[%s1575 + $0x28] sm:$0xff]
    %v1582 = vld [vmem:[%s1575 + $0x30] sm:$0xff]
    %v1583 = vld [vmem:[%s1575 + $0x38] sm:$0xff]
    %v1584 = vld [vmem:[%s1575 + $0x40] sm:$0xff]
    %v1585 = vld [vmem:[%s1575 + $0x48] sm:$0xff]
    %v1586 = vld [vmem:[%s1575 + $0x50] sm:$0xff]
    %v1587 = vld [vmem:[%s1575 + $0x58] sm:$0xff]
    %v1588 = vld [vmem:[%s1575 + $0x60] sm:$0xff]
    %v1589 = vld [vmem:[%s1575 + $0x68] sm:$0xff]
    %v1590 = vld [vmem:[%s1575 + $0x70] sm:$0xff]
    %v1591 = vld [vmem:[%s1575 + $0x78] sm:$0xff]
    %v1592 = vld [vmem:[%s1575 + $0x80] sm:$0xff]
    %v1593 = vld [vmem:[%s1575 + $0x88] sm:$0xff]
    %v1594 = vld [vmem:[%s1575 + $0x90] sm:$0xff]
    %v1595 = vld [vmem:[%s1575 + $0x98] sm:$0xff]
    %v1596 = vld [vmem:[%s1575 + $0xa0] sm:$0xff]
    %v1597 = vld [vmem:[%s1575 + $0xa8] sm:$0xff]
    %v1598 = vld [vmem:[%s1575 + $0xb0] sm:$0xff]
    %v1599 = vld [vmem:[%s1575 + $0xb8] sm:$0xff]
    %v1600 = vld [vmem:[%s1575 + $0xc0] sm:$0xf]
    %1603 = vst [vmem:[#allocation1] ss:$9 sm:$0xff] %v1572
    %s1604 = scalar_lea.vmem [#allocation1], 1
    %1605 = vst [vmem:[%s1604] ss:$9 sm:$0xff] %v1574
    %v1606 = vld [vmem:[#allocation1] sm:$0xff]
    %v1607 = vld [vmem:[#allocation1 + $0x9] sm:$0xff]
    %v1609 = vsel %vm564, %v1607, 0
    %v1612 = vsel %vm763, %v1600, 0
    %1614 = vmatpush.msra.mxu0 %v1591
    %1615 = vmatpush.msra.mxu0 %v1590
    %1616 = vmatpush.msra.mxu0 %v1589
    %1617 = vmatpush.msra.mxu0 %v1588
    %1618 = vmatpush.msra.mxu0 %v1587
    %1619 = vmatpush.msra.mxu0 %v1586
    %1620 = vmatpush.msra.mxu0 %v1585
    %1621 = vmatpush.msra.mxu0 %v1584
    %1622 = vmatpush.msra.mxu0 %v1583
    %1623 = vmatpush.msra.mxu0 %v1582
    %1624 = vmatpush.msra.mxu0 %v1581
    %1625 = vmatpush.msra.mxu0 %v1580
    %1626 = vmatpush.msra.mxu0 %v1579
    %1627 = vmatpush.msra.mxu0 %v1578
    %1628 = vmatpush.msra.mxu0 %v1577
    %1629 = vmatpush.msra.mxu0 %v1576
    %1630 = vmatmul.f32.gmra.mxu0 %v1606
    %v1631 = vpop.f32.mrf.mxu0
    %v1632 = vadd.f32 0.0, %v1631
    %1633 = vdwg.mxu0
    %1634 = vmatpush.msra.mxu0 0.0
    %1635 = vmatpush.msra.mxu0 0.0
    %1636 = vmatpush.msra.mxu0 0.0
    %1637 = vmatpush.msra.mxu0 0.0
    %1638 = vmatpush.msra.mxu0 0.0
    %1639 = vmatpush.msra.mxu0 0.0
    %1640 = vmatpush.msra.mxu0 0.0
    %1641 = vmatpush.msra.mxu0 %v1612
    %1642 = vmatpush.msra.mxu0 %v1599
    %1643 = vmatpush.msra.mxu0 %v1598
    %1644 = vmatpush.msra.mxu0 %v1597
    %1645 = vmatpush.msra.mxu0 %v1596
    %1646 = vmatpush.msra.mxu0 %v1595
    %1647 = vmatpush.msra.mxu0 %v1594
    %1648 = vmatpush.msra.mxu0 %v1593
    %1649 = vmatpush.msra.mxu0 %v1592
    %1650 = vmatmul.f32.gmra.mxu0 %v1609
    %v1651 = vpop.f32.mrf.mxu0
    %v1652 = vadd.f32 %v1632, %v1651
    %1653 = vdwg.mxu0
    %v1654 = vadd.f32 %v1570, %v1652
    %s1655 = scalar_lea.vmem [#allocation2], 2
    %v1656 = vld [vmem:[%s1655] ss:$4 sm:$0x3]
    %s1657 = scalar_lea.vmem [#allocation2], 10
    %v1658 = vld [vmem:[%s1657] ss:$4 sm:$0x3]
    %s1659 = scalar_lea.vmem %s7, 400
    %v1660 = vld [vmem:[%s1659] sm:$0xff]
    %v1661 = vld [vmem:[%s1659 + $0x8] sm:$0xff]
    %v1662 = vld [vmem:[%s1659 + $0x10] sm:$0xff]
    %v1663 = vld [vmem:[%s1659 + $0x18] sm:$0xff]
    %v1664 = vld [vmem:[%s1659 + $0x20] sm:$0xff]
    %v1665 = vld [vmem:[%s1659 + $0x28] sm:$0xff]
    %v1666 = vld [vmem:[%s1659 + $0x30] sm:$0xff]
    %v1667 = vld [vmem:[%s1659 + $0x38] sm:$0xff]
    %v1668 = vld [vmem:[%s1659 + $0x40] sm:$0xff]
    %v1669 = vld [vmem:[%s1659 + $0x48] sm:$0xff]
    %v1670 = vld [vmem:[%s1659 + $0x50] sm:$0xff]
    %v1671 = vld [vmem:[%s1659 + $0x58] sm:$0xff]
    %v1672 = vld [vmem:[%s1659 + $0x60] sm:$0xff]
    %v1673 = vld [vmem:[%s1659 + $0x68] sm:$0xff]
    %v1674 = vld [vmem:[%s1659 + $0x70] sm:$0xff]
    %v1675 = vld [vmem:[%s1659 + $0x78] sm:$0xff]
    %v1676 = vld [vmem:[%s1659 + $0x80] sm:$0xff]
    %v1677 = vld [vmem:[%s1659 + $0x88] sm:$0xff]
    %v1678 = vld [vmem:[%s1659 + $0x90] sm:$0xff]
    %v1679 = vld [vmem:[%s1659 + $0x98] sm:$0xff]
    %v1680 = vld [vmem:[%s1659 + $0xa0] sm:$0xff]
    %v1681 = vld [vmem:[%s1659 + $0xa8] sm:$0xff]
    %v1682 = vld [vmem:[%s1659 + $0xb0] sm:$0xff]
    %v1683 = vld [vmem:[%s1659 + $0xb8] sm:$0xff]
    %v1684 = vld [vmem:[%s1659 + $0xc0] sm:$0xf]
    %1687 = vst [vmem:[#allocation1] ss:$9 sm:$0xff] %v1656
    %s1688 = scalar_lea.vmem [#allocation1], 1
    %1689 = vst [vmem:[%s1688] ss:$9 sm:$0xff] %v1658
    %v1690 = vld [vmem:[#allocation1] sm:$0xff]
    %v1691 = vld [vmem:[#allocation1 + $0x9] sm:$0xff]
    %v1693 = vsel %vm564, %v1691, 0
    %v1696 = vsel %vm763, %v1684, 0
    %1698 = vmatpush.msra.mxu0 %v1675
    %1699 = vmatpush.msra.mxu0 %v1674
    %1700 = vmatpush.msra.mxu0 %v1673
    %1701 = vmatpush.msra.mxu0 %v1672
    %1702 = vmatpush.msra.mxu0 %v1671
    %1703 = vmatpush.msra.mxu0 %v1670
    %1704 = vmatpush.msra.mxu0 %v1669
    %1705 = vmatpush.msra.mxu0 %v1668
    %1706 = vmatpush.msra.mxu0 %v1667
    %1707 = vmatpush.msra.mxu0 %v1666
    %1708 = vmatpush.msra.mxu0 %v1665
    %1709 = vmatpush.msra.mxu0 %v1664
    %1710 = vmatpush.msra.mxu0 %v1663
    %1711 = vmatpush.msra.mxu0 %v1662
    %1712 = vmatpush.msra.mxu0 %v1661
    %1713 = vmatpush.msra.mxu0 %v1660
    %1714 = vmatmul.f32.gmra.mxu0 %v1690
    %v1715 = vpop.f32.mrf.mxu0
    %v1716 = vadd.f32 0.0, %v1715
    %1717 = vdwg.mxu0
    %1718 = vmatpush.msra.mxu0 0.0
    %1719 = vmatpush.msra.mxu0 0.0
    %1720 = vmatpush.msra.mxu0 0.0
    %1721 = vmatpush.msra.mxu0 0.0
    %1722 = vmatpush.msra.mxu0 0.0
    %1723 = vmatpush.msra.mxu0 0.0
    %1724 = vmatpush.msra.mxu0 0.0
    %1725 = vmatpush.msra.mxu0 %v1696
    %1726 = vmatpush.msra.mxu0 %v1683
    %1727 = vmatpush.msra.mxu0 %v1682
    %1728 = vmatpush.msra.mxu0 %v1681
    %1729 = vmatpush.msra.mxu0 %v1680
    %1730 = vmatpush.msra.mxu0 %v1679
    %1731 = vmatpush.msra.mxu0 %v1678
    %1732 = vmatpush.msra.mxu0 %v1677
    %1733 = vmatpush.msra.mxu0 %v1676
    %1734 = vmatmul.f32.gmra.mxu0 %v1693
    %v1735 = vpop.f32.mrf.mxu0
    %v1736 = vadd.f32 %v1716, %v1735
    %1737 = vdwg.mxu0
    %v1738 = vadd.f32 %v1654, %v1736
    %v1739 = vmax.f32 %v1738, 0.0
    %v1740 = vld [vmem:[%s9] sm:$0xff]
    %v1741 = vld [vmem:[%s9 + $0x8] sm:$0xff]
    %v1742 = vld [vmem:[%s9 + $0x10] sm:$0xff]
    %v1743 = vld [vmem:[%s9 + $0x18] sm:$0xff]
    %v1744 = vld [vmem:[%s9 + $0x20] sm:$0xff]
    %v1745 = vld [vmem:[%s9 + $0x28] sm:$0xff]
    %v1746 = vld [vmem:[%s9 + $0x30] sm:$0xff]
    %v1747 = vld [vmem:[%s9 + $0x38] sm:$0xf]
    %v1748 = vld [vmem:[%s10] sm:$0x1]
    %v1750 = vperm.slane %v1748, 0
    %vm1752 = vcmask 490496
    %v1754 = vsel %vm1752, %v1739, 0
    %v1757 = vsel %vm763, %v1747, 0
    %1759 = vmatpush.msra.mxu0 0.0
    %1760 = vmatpush.msra.mxu0 0.0
    %1761 = vmatpush.msra.mxu0 0.0
    %1762 = vmatpush.msra.mxu0 0.0
    %1763 = vmatpush.msra.mxu0 0.0
    %1764 = vmatpush.msra.mxu0 0.0
    %1765 = vmatpush.msra.mxu0 0.0
    %1766 = vmatpush.msra.mxu0 0.0
    %1767 = vmatpush.msra.mxu0 %v1757
    %1768 = vmatpush.msra.mxu0 %v1746
    %1769 = vmatpush.msra.mxu0 %v1745
    %1770 = vmatpush.msra.mxu0 %v1744
    %1771 = vmatpush.msra.mxu0 %v1743
    %1772 = vmatpush.msra.mxu0 %v1742
    %1773 = vmatpush.msra.mxu0 %v1741
    %1774 = vmatpush.msra.mxu0 %v1740
    %1775 = vmatmul.f32.gmra.mxu0 %v1754
    %v1776 = vpop.f32.mrf.mxu0
    %v1777 = vadd.f32 %v1750, %v1776
    %1778 = vdwg.mxu0
    %v1780 = vrot.slane %v1777, 1
    %vm1782 = vcmask 237568
    %1783 = vst.msk [vmem:[#allocation3] sm:$0x1] %vm1782, %v1777
    %1784 = vst.msk [vmem:[#allocation3 + $0x1] sm:$0x1] %vm1782, %v1780
    // Predicated region
    $region46: #{tpu_custom_call.1} parent=1 // pred_check
      _
    $region47: #{tpu_custom_call.1} parent=1 // pred_check_branch
      %1786 = sbr.rel (0) target = $region49
    $region48: #{tpu_custom_call.1} parent=1 // pred_region
      _
    $region49: #{tpu_custom_call.1} parent=1 // pred_fallthru
      _
    // Predicated region
    $region50: #{tpu_custom_call.1} parent=1 // pred_check
      _
    $region51: #{tpu_custom_call.1} parent=1 // pred_check_branch
      %1788 = sbr.rel (0) target = $region53
    $region52: #{tpu_custom_call.1} parent=1 // pred_region
      %1790 = vsyncadd [#allocation4], 0
      %s1791 = sshll.u32 [#allocation3], 4
      %s1792 = int_to_ptr.vmem [resolvable:$true] %s1791
      %s1793 = sshll.u32 %s12, 4
      %s1794 = int_to_ptr.hbm [resolvable:$true] %s1793
      %1799 = dma.vmem_to_hbm [thread:$0]  %s1792, 32, %s1794, [#allocation4], 16, 16, 1
    $region53: #{tpu_custom_call.1} parent=1 // pred_fallthru
      _
    // Predicated region
    $region54: #{tpu_custom_call.1} parent=1 // pred_check
      _
    $region55: #{tpu_custom_call.1} parent=1 // pred_check_branch
      %1801 = sbr.rel (0) target = $region57
    $region56: #{tpu_custom_call.1} parent=1 // pred_region
      _
    $region57: #{tpu_custom_call.1} parent=1 // pred_fallthru
      _
    // Predicated region
    $region58: #{tpu_custom_call.1} parent=1 // pred_check
      _
    $region59: #{tpu_custom_call.1} parent=1 // pred_check_branch
      %1803 = sbr.rel (0) target = $region61
    $region60: #{tpu_custom_call.1} parent=1 // pred_region
      %1805 = dma.done [#allocation4], 32
    $region61: #{tpu_custom_call.1} parent=1 // pred_fallthru
      _
    %1806 = vsyncpa [#allocation4], 1

</llo_original>
